<compile_context>
chip_gen: v5e
topology: v5e:2x2
jax: 0.10.0
libtpu: 0.0.40
codegen_flags: <defaults>
</compile_context>

<pallas_src>
import functools

import jax
import jax.numpy as jnp
from jax.experimental import pallas as pl
from jax.experimental.pallas import tpu as pltpu

EPS = 1e-5      # PyTorch BatchNorm1d default
_LANE = 128


def _mixer_kernel(x_ref, s_ref, w_ref, v_ref, out_ref, *, offs, T, F, E):
    """All activations are (channels*T, TB): sublanes = channel*T + t, lanes = batch."""
    f32 = jnp.float32
    FT, ET, OT = F * T, E * T, 2 * E * T

    def W(name):                                   # static view into the weight slab
        r0, nr, nc = offs[name]
        return w_ref[r0:r0 + nr, 0:nc]

    def vec(col, n):                               # (n, 1) column -> lane-broadcast
        return v_ref[0:n, col:col + 1]

    xk = x_ref[...]                                # (F*T, TB)
    sk = s_ref[...]                                # (S*T, TB)

    # ---------------- MLP_Time_Block: one kron(I_F, Wt) GEMM ----------------
    v = jnp.maximum(jnp.dot(W("wt"), xk, preferred_element_type=f32) + vec(0, FT), 0.0)
    x1 = (xk + v) * vec(1, FT) + vec(2, FT)        # residual + per-time-row BN

    # -------- mlp_s = MLP_Feat(S, E); its BN folded into the concat weights --------
    sc = jnp.dot(W("ws_cat"), sk, preferred_element_type=f32)     # [mlp1 ; projector]
    vs = jnp.maximum(sc[0:ET, :] + vec(3, ET), 0.0)
    us = jnp.dot(W("w2s"), vs, preferred_element_type=f32) + vec(4, ET)
    hs = sc[ET:2 * ET, :] + vec(5, ET)
    se = hs + us                                   # pre-BN (BN folded downstream)

    # -------- mlp_feat = MLP_Feat(F+E, F) on cat([x1, se]); its BN folded into wproj --------
    xc = jnp.dot(W("wx1_cat"), x1, preferred_element_type=f32)    # [mlp1-A ; proj-A]
    ec = jnp.dot(W("wse_cat"), se, preferred_element_type=f32)    # [mlp1-B ; proj-B]
    vf = jnp.maximum(xc[0:FT, :] + ec[0:FT, :] + vec(6, FT), 0.0)
    uf = jnp.dot(W("w2f"), vf, preferred_element_type=f32) + vec(7, FT)
    hf = xc[FT:2 * FT, :] + ec[FT:2 * FT, :] + vec(8, FT)
    outf = hf + uf                                 # pre-BN (BN folded into projector)

    # ---------------- projector Linear(F, 2E) (feature BN pre-folded) ----------------
    y = jnp.dot(W("wproj"), outf, preferred_element_type=f32) + vec(9, OT)
    out_ref[...] = y                               # (O*T, TB), lane-dense unmasked store


def _fold_bn(gamma, beta, mean, var):
    scale = gamma / jnp.sqrt(var + EPS)
    shift = beta - mean * scale
    return scale, shift


def _choose_blocks(B, max_single_cols):
    """Pick (padded batch, block width).  Lanes = batch, so TB must be a multiple
    of 128 (or the full padded batch).  Small batches -> single step; large
    batches -> an even number of ~1K-wide steps (clean v7x 2-TC split)."""
    Bp = -(-B // _LANE) * _LANE
    if Bp <= max_single_cols:
        return Bp, Bp
    nsteps = max(2, int(round(Bp / 1024)))
    if nsteps % 2:
        nsteps += 1
    tb = -(-Bp // nsteps)
    TB = -(-tb // _LANE) * _LANE
    return TB * nsteps, TB


def mixer_block(x, s, p, max_single_block_cols=2048):
    """x: (B, T, F) float32, s: (B, T, S) float32 -> (B, T, 2E) float32."""
    f32 = jnp.float32
    B, T, F = x.shape
    S = s.shape[2]
    E = p["w1s"].shape[0]          # PyTorch Linear weight (out, in) = (E, S)
    O = 2 * E
    FT, ST, OT = F * T, S * T, O * T

    Bp, TB = _choose_blocks(B, max_single_block_cols)
    if Bp != B:
        x = jnp.pad(x, ((0, Bp - B), (0, 0), (0, 0)))
        s = jnp.pad(s, ((0, Bp - B), (0, 0), (0, 0)))

    # channels-x-rows layout (done once by XLA): rows = channel*T + t, lanes = batch
    xk = x.astype(f32).transpose(2, 1, 0).reshape(FT, Bp)
    sk = s.astype(f32).transpose(2, 1, 0).reshape(ST, Bp)

    # ---- fold the three BatchNorms (inference / running stats) ----
    tsc, tsh = _fold_bn(p["bn_t_g"], p["bn_t_b"], p["bn_t_m"], p["bn_t_v"])   # per-time (T,)
    ssc, ssh = _fold_bn(p["bn_s_g"], p["bn_s_b"], p["bn_s_m"], p["bn_s_v"])   # per-E
    fsc, fsh = _fold_bn(p["bn_f_g"], p["bn_f_b"], p["bn_f_m"], p["bn_f_v"])   # per-F

    I_T = jnp.eye(T, dtype=f32)

    def kt(w):   # per-(b,t)-row Linear  ->  kron(W, I_T) acting on (in*T, lanes)
        return jnp.kron(w.astype(f32), I_T)

    # split concat-input weights; fold static-branch BN into se-consuming weights,
    # feature-branch BN into the final projector
    w1a, w1b = p["w1f"][:, :F], p["w1f"][:, F:] * ssc[None, :]
    wpa, wpb = p["wpf"][:, :F], p["wpf"][:, F:] * ssc[None, :]
    b1f = p["b1f"] + p["w1f"][:, F:] @ ssh
    bpf = p["bpf"] + p["wpf"][:, F:] @ ssh
    wproj = p["wproj"] * fsc[None, :]
    bproj = p["bproj"] + p["wproj"] @ fsh

    mats = [
        ("wt",      jnp.kron(jnp.eye(F, dtype=f32), p["wt"].astype(f32))),   # time mix
        ("ws_cat",  jnp.concatenate([kt(p["w1s"]), kt(p["wps"])], axis=0)),  # mlp_s mlp1+proj
        ("w2s",     kt(p["w2s"])),
        ("wx1_cat", jnp.concatenate([kt(w1a), kt(wpa)], axis=0)),            # feat mlp1+proj (x1 part)
        ("wse_cat", jnp.concatenate([kt(w1b), kt(wpb)], axis=0)),            # feat mlp1+proj (se part)
        ("w2f",     kt(p["w2f"])),
        ("wproj",   kt(wproj)),
    ]
    wcols = -(-max(m.shape[1] for _, m in mats) // _LANE) * _LANE
    offs, rows, r = {}, [], 0
    for name, m in mats:
        nr, nc = m.shape
        offs[name] = (r, nr, nc)
        pr = (-nr) % 8
        rows.append(jnp.pad(m.astype(f32), ((0, pr), (0, wcols - nc))))
        r += nr + pr
    wslab = jnp.concatenate(rows, axis=0)                     # one weight slab

    vecs = [
        jnp.tile(p["bt"].astype(f32), F), jnp.tile(tsc, F), jnp.tile(tsh, F),
        jnp.repeat(p["b1s"].astype(f32), T), jnp.repeat(p["b2s"].astype(f32), T),
        jnp.repeat(p["bps"].astype(f32), T),
        jnp.repeat(b1f.astype(f32), T), jnp.repeat(p["b2f"].astype(f32), T),
        jnp.repeat(bpf.astype(f32), T),
        jnp.repeat(bproj.astype(f32), T),
    ]
    vrows = -(-max(v.shape[0] for v in vecs) // 8) * 8
    vslab = jnp.stack([jnp.pad(v, (0, vrows - v.shape[0])) for v in vecs], axis=1)

    kernel = functools.partial(_mixer_kernel, offs=offs, T=T, F=F, E=E)

    # Per-block VMEM: in/out blocks (double-buffered) + both slabs stay in the
    # low-MB range even at TB=1024, well under the scoped default on v5e/v6e/v7x.
    yk = pl.pallas_call(
        kernel,
        out_shape=jax.ShapeDtypeStruct((OT, Bp), f32),
        grid=(Bp // TB,),
        in_specs=[
            pl.BlockSpec((FT, TB), lambda b: (0, b)),
            pl.BlockSpec((ST, TB), lambda b: (0, b)),
            pl.BlockSpec(wslab.shape, lambda b: (0, 0)),
            pl.BlockSpec(vslab.shape, lambda b: (0, 0)),
        ],
        out_specs=pl.BlockSpec((OT, TB), lambda b: (0, b)),
        compiler_params=pltpu.CompilerParams(dimension_semantics=("parallel",)),
    )(xk, sk, wslab, vslab)

    return yk.reshape(O, T, Bp).transpose(2, 1, 0)[:B]


def ref_forward(x, s, p):
    """Pure-JAX reference mirroring the PyTorch forward (inference mode)."""
    hi = jax.lax.Precision.HIGHEST

    # MLP_Time_Block
    v = jax.nn.relu(jnp.einsum("ti,bif->btf", p["wt"], x, precision=hi)
                    + p["bt"][None, :, None])
    h1 = x + v
    x1 = ((h1 - p["bn_t_m"][None, :, None])
          / jnp.sqrt(p["bn_t_v"] + EPS)[None, :, None]
          * p["bn_t_g"][None, :, None] + p["bn_t_b"][None, :, None])

    # mlp_s = MLP_Feat(S, E)
    vs = jax.nn.relu(jnp.einsum("bts,es->bte", s, p["w1s"], precision=hi) + p["b1s"])
    us = jnp.einsum("bte,oe->bto", vs, p["w2s"], precision=hi) + p["b2s"]
    hs = jnp.einsum("bts,es->bte", s, p["wps"], precision=hi) + p["bps"]
    se = ((hs + us) - p["bn_s_m"]) / jnp.sqrt(p["bn_s_v"] + EPS) * p["bn_s_g"] + p["bn_s_b"]

    # mlp_feat = MLP_Feat(F+E, F) on concat
    c = jnp.concatenate([x1, se], axis=2)
    vf = jax.nn.relu(jnp.einsum("btc,oc->bto", c, p["w1f"], precision=hi) + p["b1f"])
    uf = jnp.einsum("btf,of->bto", vf, p["w2f"], precision=hi) + p["b2f"]
    hf = jnp.einsum("btc,oc->bto", c, p["wpf"], precision=hi) + p["bpf"]
    outf = ((hf + uf) - p["bn_f_m"]) / jnp.sqrt(p["bn_f_v"] + EPS) * p["bn_f_g"] + p["bn_f_b"]

    # projector
    return jnp.einsum("btf,of->bto", outf, p["wproj"], precision=hi) + p["bproj"]


if __name__ == "__main__":
    # Small model dims; batch exercises padding.  Also runs a forced multi-block call.
    B, T, F, S, E = 300, 8, 8, 4, 16   # batch, fcst_h, n_feat, n_static_feat, embed_dim
    key = jax.random.PRNGKey(0)
    ks = jax.random.split(key, 32)

    def w(k, shape, scale=0.1):
        return (scale * jax.random.normal(k, shape)).astype(jnp.float32)

    params = {
        # MLP_Time_Block
        "wt": w(ks[0], (T, T)), "bt": w(ks[1], (T,), 0.05),
        "bn_t_g": 1.0 + w(ks[2], (T,)), "bn_t_b": w(ks[3], (T,), 0.05),
        "bn_t_m": w(ks[4], (T,), 0.05),
        "bn_t_v": 0.5 + jax.random.uniform(ks[5], (T,), jnp.float32),
        # mlp_s = MLP_Feat(S, E)  (PyTorch Linear weights: (out, in))
        "w1s": w(ks[6], (E, S)), "b1s": w(ks[7], (E,), 0.05),
        "w2s": w(ks[8], (E, E)), "b2s": w(ks[9], (E,), 0.05),
        "wps": w(ks[10], (E, S)), "bps": w(ks[11], (E,), 0.05),
        "bn_s_g": 1.0 + w(ks[12], (E,)), "bn_s_b": w(ks[13], (E,), 0.05),
        "bn_s_m": w(ks[14], (E,), 0.05),
        "bn_s_v": 0.5 + jax.random.uniform(ks[15], (E,), jnp.float32),
        # mlp_feat = MLP_Feat(F+E, F)
        "w1f": w(ks[16], (F, F + E)), "b1f": w(ks[17], (F,), 0.05),
        "w2f": w(ks[18], (F, F)), "b2f": w(ks[19], (F,), 0.05),
        "wpf": w(ks[20], (F, F + E)), "bpf": w(ks[21], (F,), 0.05),
        "bn_f_g": 1.0 + w(ks[22], (F,)), "bn_f_b": w(ks[23], (F,), 0.05),
        "bn_f_m": w(ks[24], (F,), 0.05),
        "bn_f_v": 0.5 + jax.random.uniform(ks[25], (F,), jnp.float32),
        # projector Linear(F, 2E)
        "wproj": w(ks[26], (2 * E, F)), "bproj": w(ks[27], (2 * E,), 0.05),
    }

    x = jax.random.normal(ks[28], (B, T, F), jnp.float32)
    s = jax.random.normal(ks[29], (B, T, S), jnp.float32)

    ref = ref_forward(x, s, params)

    # default path: single grid step (recommended for small batches)
    out = jax.block_until_ready(mixer_block(x, s, params))
    assert out.shape == (B, T, 2 * E), out.shape
    assert jnp.isfinite(out).all()
    err1 = float(jnp.max(jnp.abs(out - ref)))
    assert err1 < 1e-2, f"single-block mismatch vs reference: {err1}"

    # forced multi-block path: exercises the grid / lane-aligned block tiling
    out2 = jax.block_until_ready(mixer_block(x, s, params, max_single_block_cols=128))
    err2 = float(jnp.max(jnp.abs(out2 - ref)))
    assert err2 < 1e-2, f"multi-block mismatch vs reference: {err2}"

    print("KERNEL_OK")
</pallas_src>

<mosaic_0001>
module attributes {stable_mosaic.version = 11 : i64} {
  func.func @_mixer_kernel(%arg0: i32, %arg1: memref<64x384xf32, #tpu.memory_space<vmem>>, %arg2: memref<32x384xf32, #tpu.memory_space<vmem>>, %arg3: memref<1024x128xf32, #tpu.memory_space<vmem>>, %arg4: memref<256x10xf32, #tpu.memory_space<vmem>>, %arg5: memref<256x384xf32, #tpu.memory_space<vmem>>) attributes {dimension_semantics = [#tpu.dimension_semantics<parallel>], iteration_bounds = array<i64: 1>, scalar_prefetch = 0 : i64, scratch_operands = 0 : i64, tpu.core_type = #tpu.core_type<tc>, window_params = [{transform_indices = @transform_0, window_bounds = array<i64: 64, 384>}, {transform_indices = @transform_1, window_bounds = array<i64: 32, 384>}, {pipeline_mode = #tpu.pipeline_mode<synchronous>, transform_indices = @transform_2, window_bounds = array<i64: 1024, 128>}, {pipeline_mode = #tpu.pipeline_mode<synchronous>, transform_indices = @transform_3, window_bounds = array<i64: 256, 10>}, {transform_indices = @transform_4, window_bounds = array<i64: 256, 384>}]} {
    %c0 = arith.constant 0 : index
    %c0_0 = arith.constant 0 : index
    %0 = vector.load %arg1[%c0, %c0_0] : memref<64x384xf32, #tpu.memory_space<vmem>>, vector<64x384xf32>
    %c0_1 = arith.constant 0 : index
    %c0_2 = arith.constant 0 : index
    %1 = vector.load %arg2[%c0_1, %c0_2] : memref<32x384xf32, #tpu.memory_space<vmem>>, vector<32x384xf32>
    %c0_3 = arith.constant 0 : index
    %c0_4 = arith.constant 0 : index
    %2 = vector.load %arg3[%c0_3, %c0_4] : memref<1024x128xf32, #tpu.memory_space<vmem>>, vector<64x64xf32>
    %cst = arith.constant dense<0.000000e+00> : vector<64x384xf32>
    %3 = tpu.matmul %2, %0, %cst {dimension_numbers = #tpu.dot_dimension_numbers<[1], [0], [0], [1], [0, 0, 1, 1], [], []>} : vector<64x64xf32>, vector<64x384xf32>, vector<64x384xf32> -> vector<64x384xf32>
    %c0_5 = arith.constant 0 : index
    %c0_6 = arith.constant 0 : index
    %4 = vector.load %arg4[%c0_5, %c0_6] : memref<256x10xf32, #tpu.memory_space<vmem>>, vector<64x1xf32>
    %5 = vector.broadcast %4 : vector<64x1xf32> to vector<64x384xf32>
    %6 = arith.addf %3, %5 : vector<64x384xf32>
    %cst_7 = arith.constant 0.000000e+00 : f32
    %7 = vector.broadcast %cst_7 : f32 to vector<64x384xf32>
    %8 = arith.maximumf %6, %7 : vector<64x384xf32>
    %9 = arith.addf %0, %8 : vector<64x384xf32>
    %c0_8 = arith.constant 0 : index
    %c1 = arith.constant 1 : index
    %10 = vector.load %arg4[%c0_8, %c1] : memref<256x10xf32, #tpu.memory_space<vmem>>, vector<64x1xf32>
    %11 = vector.broadcast %10 : vector<64x1xf32> to vector<64x384xf32>
    %12 = arith.mulf %9, %11 : vector<64x384xf32>
    %c0_9 = arith.constant 0 : index
    %c2 = arith.constant 2 : index
    %13 = vector.load %arg4[%c0_9, %c2] : memref<256x10xf32, #tpu.memory_space<vmem>>, vector<64x1xf32>
    %14 = vector.broadcast %13 : vector<64x1xf32> to vector<64x384xf32>
    %15 = arith.addf %12, %14 : vector<64x384xf32>
    %c64 = arith.constant 64 : index
    %c0_10 = arith.constant 0 : index
    %16 = vector.load %arg3[%c64, %c0_10] : memref<1024x128xf32, #tpu.memory_space<vmem>>, vector<256x32xf32>
    %cst_11 = arith.constant dense<0.000000e+00> : vector<256x384xf32>
    %17 = tpu.matmul %16, %1, %cst_11 {dimension_numbers = #tpu.dot_dimension_numbers<[1], [0], [0], [1], [0, 0, 1, 1], [], []>} : vector<256x32xf32>, vector<32x384xf32>, vector<256x384xf32> -> vector<256x384xf32>
    %18 = vector.extract_strided_slice %17 {offsets = [0, 0], sizes = [128, 384], strides = [1, 1]} : vector<256x384xf32> to vector<128x384xf32>
    %c0_12 = arith.constant 0 : index
    %c3 = arith.constant 3 : index
    %19 = vector.load %arg4[%c0_12, %c3] : memref<256x10xf32, #tpu.memory_space<vmem>>, vector<128x1xf32>
    %20 = vector.broadcast %19 : vector<128x1xf32> to vector<128x384xf32>
    %21 = arith.addf %18, %20 : vector<128x384xf32>
    %cst_13 = arith.constant 0.000000e+00 : f32
    %22 = vector.broadcast %cst_13 : f32 to vector<128x384xf32>
    %23 = arith.maximumf %21, %22 : vector<128x384xf32>
    %c320 = arith.constant 320 : index
    %c0_14 = arith.constant 0 : index
    %24 = vector.load %arg3[%c320, %c0_14] : memref<1024x128xf32, #tpu.memory_space<vmem>>, vector<128x128xf32>
    %cst_15 = arith.constant dense<0.000000e+00> : vector<128x384xf32>
    %25 = tpu.matmul %24, %23, %cst_15 {dimension_numbers = #tpu.dot_dimension_numbers<[1], [0], [0], [1], [0, 0, 1, 1], [], []>} : vector<128x128xf32>, vector<128x384xf32>, vector<128x384xf32> -> vector<128x384xf32>
    %c0_16 = arith.constant 0 : index
    %c4 = arith.constant 4 : index
    %26 = vector.load %arg4[%c0_16, %c4] : memref<256x10xf32, #tpu.memory_space<vmem>>, vector<128x1xf32>
    %27 = vector.broadcast %26 : vector<128x1xf32> to vector<128x384xf32>
    %28 = arith.addf %25, %27 : vector<128x384xf32>
    %29 = vector.extract_strided_slice %17 {offsets = [128, 0], sizes = [128, 384], strides = [1, 1]} : vector<256x384xf32> to vector<128x384xf32>
    %c0_17 = arith.constant 0 : index
    %c5 = arith.constant 5 : index
    %30 = vector.load %arg4[%c0_17, %c5] : memref<256x10xf32, #tpu.memory_space<vmem>>, vector<128x1xf32>
    %31 = vector.broadcast %30 : vector<128x1xf32> to vector<128x384xf32>
    %32 = arith.addf %29, %31 : vector<128x384xf32>
    %33 = arith.addf %32, %28 : vector<128x384xf32>
    %c448 = arith.constant 448 : index
    %c0_18 = arith.constant 0 : index
    %34 = vector.load %arg3[%c448, %c0_18] : memref<1024x128xf32, #tpu.memory_space<vmem>>, vector<128x64xf32>
    %cst_19 = arith.constant dense<0.000000e+00> : vector<128x384xf32>
    %35 = tpu.matmul %34, %15, %cst_19 {dimension_numbers = #tpu.dot_dimension_numbers<[1], [0], [0], [1], [0, 0, 1, 1], [], []>} : vector<128x64xf32>, vector<64x384xf32>, vector<128x384xf32> -> vector<128x384xf32>
    %c576 = arith.constant 576 : index
    %c0_20 = arith.constant 0 : index
    %36 = vector.load %arg3[%c576, %c0_20] : memref<1024x128xf32, #tpu.memory_space<vmem>>, vector<128x128xf32>
    %cst_21 = arith.constant dense<0.000000e+00> : vector<128x384xf32>
    %37 = tpu.matmul %36, %33, %cst_21 {dimension_numbers = #tpu.dot_dimension_numbers<[1], [0], [0], [1], [0, 0, 1, 1], [], []>} : vector<128x128xf32>, vector<128x384xf32>, vector<128x384xf32> -> vector<128x384xf32>
    %38 = vector.extract_strided_slice %35 {offsets = [0, 0], sizes = [64, 384], strides = [1, 1]} : vector<128x384xf32> to vector<64x384xf32>
    %39 = vector.extract_strided_slice %37 {offsets = [0, 0], sizes = [64, 384], strides = [1, 1]} : vector<128x384xf32> to vector<64x384xf32>
    %40 = arith.addf %38, %39 : vector<64x384xf32>
    %c0_22 = arith.constant 0 : index
    %c6 = arith.constant 6 : index
    %41 = vector.load %arg4[%c0_22, %c6] : memref<256x10xf32, #tpu.memory_space<vmem>>, vector<64x1xf32>
    %42 = vector.broadcast %41 : vector<64x1xf32> to vector<64x384xf32>
    %43 = arith.addf %40, %42 : vector<64x384xf32>
    %cst_23 = arith.constant 0.000000e+00 : f32
    %44 = vector.broadcast %cst_23 : f32 to vector<64x384xf32>
    %45 = arith.maximumf %43, %44 : vector<64x384xf32>
    %c704 = arith.constant 704 : index
    %c0_24 = arith.constant 0 : index
    %46 = vector.load %arg3[%c704, %c0_24] : memref<1024x128xf32, #tpu.memory_space<vmem>>, vector<64x64xf32>
    %cst_25 = arith.constant dense<0.000000e+00> : vector<64x384xf32>
    %47 = tpu.matmul %46, %45, %cst_25 {dimension_numbers = #tpu.dot_dimension_numbers<[1], [0], [0], [1], [0, 0, 1, 1], [], []>} : vector<64x64xf32>, vector<64x384xf32>, vector<64x384xf32> -> vector<64x384xf32>
    %c0_26 = arith.constant 0 : index
    %c7 = arith.constant 7 : index
    %48 = vector.load %arg4[%c0_26, %c7] : memref<256x10xf32, #tpu.memory_space<vmem>>, vector<64x1xf32>
    %49 = vector.broadcast %48 : vector<64x1xf32> to vector<64x384xf32>
    %50 = arith.addf %47, %49 : vector<64x384xf32>
    %51 = vector.extract_strided_slice %35 {offsets = [64, 0], sizes = [64, 384], strides = [1, 1]} : vector<128x384xf32> to vector<64x384xf32>
    %52 = vector.extract_strided_slice %37 {offsets = [64, 0], sizes = [64, 384], strides = [1, 1]} : vector<128x384xf32> to vector<64x384xf32>
    %53 = arith.addf %51, %52 : vector<64x384xf32>
    %c0_27 = arith.constant 0 : index
    %c8 = arith.constant 8 : index
    %54 = vector.load %arg4[%c0_27, %c8] : memref<256x10xf32, #tpu.memory_space<vmem>>, vector<64x1xf32>
    %55 = vector.broadcast %54 : vector<64x1xf32> to vector<64x384xf32>
    %56 = arith.addf %53, %55 : vector<64x384xf32>
    %57 = arith.addf %56, %50 : vector<64x384xf32>
    %c768 = arith.constant 768 : index
    %c0_28 = arith.constant 0 : index
    %58 = vector.load %arg3[%c768, %c0_28] : memref<1024x128xf32, #tpu.memory_space<vmem>>, vector<256x64xf32>
    %cst_29 = arith.constant dense<0.000000e+00> : vector<256x384xf32>
    %59 = tpu.matmul %58, %57, %cst_29 {dimension_numbers = #tpu.dot_dimension_numbers<[1], [0], [0], [1], [0, 0, 1, 1], [], []>} : vector<256x64xf32>, vector<64x384xf32>, vector<256x384xf32> -> vector<256x384xf32>
    %c0_30 = arith.constant 0 : index
    %c9 = arith.constant 9 : index
    %60 = vector.load %arg4[%c0_30, %c9] : memref<256x10xf32, #tpu.memory_space<vmem>>, vector<256x1xf32>
    %61 = vector.broadcast %60 : vector<256x1xf32> to vector<256x384xf32>
    %62 = arith.addf %59, %61 : vector<256x384xf32>
    %c0_31 = arith.constant 0 : index
    %c0_32 = arith.constant 0 : index
    %63 = vector.load %arg5[%c0_31, %c0_32] : memref<256x384xf32, #tpu.memory_space<vmem>>, vector<256x384xf32>
    tpu.vector_store %arg5[%c0_31, %c0_32], %62 {strides = array<i32>} : memref<256x384xf32, #tpu.memory_space<vmem>>, vector<256x384xf32>,
    return
  }
  func.func @transform_0(%arg0: i32) -> (i32, i32) {
    %c0_i32 = arith.constant 0 : i32
    %c0_i32_0 = arith.constant 0 : i32
    return %c0_i32, %arg0 : i32, i32
  }
  func.func @transform_1(%arg0: i32) -> (i32, i32) {
    %c0_i32 = arith.constant 0 : i32
    %c0_i32_0 = arith.constant 0 : i32
    return %c0_i32, %arg0 : i32, i32
  }
  func.func @transform_2(%arg0: i32) -> (i32, i32) {
    %c0_i32 = arith.constant 0 : i32
    %c0_i32_0 = arith.constant 0 : i32
    %c0_i32_1 = arith.constant 0 : i32
    return %c0_i32, %c0_i32_0 : i32, i32
  }
  func.func @transform_3(%arg0: i32) -> (i32, i32) {
    %c0_i32 = arith.constant 0 : i32
    %c0_i32_0 = arith.constant 0 : i32
    %c0_i32_1 = arith.constant 0 : i32
    return %c0_i32, %c0_i32_0 : i32, i32
  }
  func.func @transform_4(%arg0: i32) -> (i32, i32) {
    %c0_i32 = arith.constant 0 : i32
    %c0_i32_0 = arith.constant 0 : i32
    return %c0_i32, %arg0 : i32, i32
  }
}

</mosaic_0001>

<llo_original>
// kernel: tpu_custom_call.1
$region0: #{tpu_custom_call.1}
  #allocation0 [shape = 'u32[]', space=smem, size = 0x4, offset = 0x4, fixed_abs, tag = 'smem constant byte address 0x4 - core index']
  #allocation1 [shape = 'u32[72,128]{1,0:T(1,128)}', space=vmem, size = 0x9000, scoped, tag = 'internal scratch']
  %s0 = inlined_call_operand.vmem [shape: f32[64,384], index: 0, kind: input, shape index: {}]
  %s1 = inlined_call_operand.vmem [shape: f32[32,384], index: 1, kind: input, shape index: {}]
  %s2 = inlined_call_operand.hbm [shape: f32[1024,128], index: 2, kind: input, shape index: {}]
  %s3 = inlined_call_operand.vmem [shape: f32[256,10], index: 3, kind: input, shape index: {}]
  %s4 = inlined_call_operand.hbm [shape: f32[256,384], index: 4, kind: output, shape index: {}]
  %s5 = sld [smem:[#allocation0]]
  $region30: #{tpu_custom_call.1} parent=0
    _
  %s7 = ssub.s32 1, %s5
  %s8 = scalar_select 0, %s7, %s5
  $region1: #{tpu_custom_call.1} parent=0
    #allocation2 [shape = 'u8[524288]{0}', space=vmem, size = 0x80000, scoped, tag = 'input window, operand 2, single buffered']
    #allocation3 [shape = 's32[1]{0}', space=sflag, size = 0x4, scoped, tag = 'scoped memory for tpu_custom_call.1']
    #allocation4 [shape = 's32[1]{0}', space=sflag, size = 0x4, scoped, tag = 'scoped memory for tpu_custom_call.1']
    #allocation5 [shape = 'u8[393216]{0}', space=vmem, size = 0x60000, scoped, tag = 'output window, operand 0, single buffered']
    %9 = vsyncpa [#allocation3], 0
    %10 = vsyncpa [#allocation4], 0
    // Predicated region
    $region2: #{tpu_custom_call.1} parent=1 // pred_check
      _
    $region3: #{tpu_custom_call.1} parent=1 // pred_check_branch
      %12 = sbr.rel (0) target = $region5
    $region4: #{tpu_custom_call.1} parent=1 // pred_region
      _
    $region5: #{tpu_custom_call.1} parent=1 // pred_fallthru
      _
    // Predicated region
    $region6: #{tpu_custom_call.1} parent=1 // pred_check
      _
    $region7: #{tpu_custom_call.1} parent=1 // pred_check_branch
      %14 = sbr.rel (0) target = $region9
    $region8: #{tpu_custom_call.1} parent=1 // pred_region
      _
    $region9: #{tpu_custom_call.1} parent=1 // pred_fallthru
      _
    // Predicated region
    $region10: #{tpu_custom_call.1} parent=1 // pred_check
      _
    $region11: #{tpu_custom_call.1} parent=1 // pred_check_branch
      %16 = sbr.rel (0) target = $region13
    $region12: #{tpu_custom_call.1} parent=1 // pred_region
      %18 = vsyncadd [#allocation3], 0
      %s19 = sshll.u32 %s2, 4
      %s20 = int_to_ptr.hbm [resolvable:$true] %s19
      %s21 = sshll.u32 [#allocation2], 4
      %s22 = int_to_ptr.vmem [resolvable:$true] %s21
      %27 = dma.hbm_to_vmem [thread:$0]  %s20, 16384, %s22, [#allocation3], 128, 128, 8
    $region13: #{tpu_custom_call.1} parent=1 // pred_fallthru
      _
    // Predicated region
    $region14: #{tpu_custom_call.1} parent=1 // pred_check
      _
    $region15: #{tpu_custom_call.1} parent=1 // pred_check_branch
      %29 = sbr.rel (0) target = $region17
    $region16: #{tpu_custom_call.1} parent=1 // pred_region
      _
    $region17: #{tpu_custom_call.1} parent=1 // pred_fallthru
      _
    // Predicated region
    $region18: #{tpu_custom_call.1} parent=1 // pred_check
      _
    $region19: #{tpu_custom_call.1} parent=1 // pred_check_branch
      %31 = sbr.rel (0) target = $region21
    $region20: #{tpu_custom_call.1} parent=1 // pred_region
      %33 = dma.done [#allocation3], 16384
    $region21: #{tpu_custom_call.1} parent=1 // pred_fallthru
      _
    %v34 = vld [vmem:[%s0] sm:$0xff]
    %v35 = vld [vmem:[%s0 + $0x8] sm:$0xff]
    %v36 = vld [vmem:[%s0 + $0x10] sm:$0xff]
    %v37 = vld [vmem:[%s0 + $0x18] sm:$0xff]
    %v38 = vld [vmem:[%s0 + $0x20] sm:$0xff]
    %v39 = vld [vmem:[%s0 + $0x28] sm:$0xff]
    %v40 = vld [vmem:[%s0 + $0x30] sm:$0xff]
    %v41 = vld [vmem:[%s0 + $0x38] sm:$0xff]
    %v42 = vld [vmem:[%s0 + $0x40] sm:$0xff]
    %v43 = vld [vmem:[%s0 + $0x48] sm:$0xff]
    %v44 = vld [vmem:[%s0 + $0x50] sm:$0xff]
    %v45 = vld [vmem:[%s0 + $0x58] sm:$0xff]
    %v46 = vld [vmem:[%s0 + $0x60] sm:$0xff]
    %v47 = vld [vmem:[%s0 + $0x68] sm:$0xff]
    %v48 = vld [vmem:[%s0 + $0x70] sm:$0xff]
    %v49 = vld [vmem:[%s0 + $0x78] sm:$0xff]
    %v50 = vld [vmem:[%s0 + $0x80] sm:$0xff]
    %v51 = vld [vmem:[%s0 + $0x88] sm:$0xff]
    %v52 = vld [vmem:[%s0 + $0x90] sm:$0xff]
    %v53 = vld [vmem:[%s0 + $0x98] sm:$0xff]
    %v54 = vld [vmem:[%s0 + $0xa0] sm:$0xff]
    %v55 = vld [vmem:[%s0 + $0xa8] sm:$0xff]
    %v56 = vld [vmem:[%s0 + $0xb0] sm:$0xff]
    %v57 = vld [vmem:[%s0 + $0xb8] sm:$0xff]
    %v58 = vld [vmem:[%s1] sm:$0xff]
    %v59 = vld [vmem:[%s1 + $0x8] sm:$0xff]
    %v60 = vld [vmem:[%s1 + $0x10] sm:$0xff]
    %v61 = vld [vmem:[%s1 + $0x18] sm:$0xff]
    %v62 = vld [vmem:[%s1 + $0x20] sm:$0xff]
    %v63 = vld [vmem:[%s1 + $0x28] sm:$0xff]
    %v64 = vld [vmem:[%s1 + $0x30] sm:$0xff]
    %v65 = vld [vmem:[%s1 + $0x38] sm:$0xff]
    %v66 = vld [vmem:[%s1 + $0x40] sm:$0xff]
    %v67 = vld [vmem:[%s1 + $0x48] sm:$0xff]
    %v68 = vld [vmem:[%s1 + $0x50] sm:$0xff]
    %v69 = vld [vmem:[%s1 + $0x58] sm:$0xff]
    %v70 = vld [vmem:[#allocation2] sm:$0xff]
    %v71 = vld [vmem:[#allocation2 + $0x8] sm:$0xff]
    %v72 = vld [vmem:[#allocation2 + $0x10] sm:$0xff]
    %v73 = vld [vmem:[#allocation2 + $0x18] sm:$0xff]
    %v74 = vld [vmem:[#allocation2 + $0x20] sm:$0xff]
    %v75 = vld [vmem:[#allocation2 + $0x28] sm:$0xff]
    %v76 = vld [vmem:[#allocation2 + $0x30] sm:$0xff]
    %v77 = vld [vmem:[#allocation2 + $0x38] sm:$0xff]
    %v78 = vld [vmem:[%s3] sm:$0xff]
    %v79 = vld [vmem:[%s3 + $0x8] sm:$0xff]
    %v80 = vld [vmem:[%s3 + $0x10] sm:$0xff]
    %v81 = vld [vmem:[%s3 + $0x18] sm:$0xff]
    %v82 = vld [vmem:[%s3 + $0x20] sm:$0xff]
    %v83 = vld [vmem:[%s3 + $0x28] sm:$0xff]
    %v84 = vld [vmem:[%s3 + $0x30] sm:$0xff]
    %v85 = vld [vmem:[%s3 + $0x38] sm:$0xff]
    %87 = vset.pattern.permute.xlu0 0
    %88 = vperm.xlu0 %87, %v78
    %v89 = vpop.permute.xlu0 %88
    %92 = vset.pattern.permute.xlu0 0
    %93 = vperm.xlu0 %92, %v79
    %v94 = vpop.permute.xlu0 %93
    %97 = vset.pattern.permute.xlu0 0
    %98 = vperm.xlu0 %97, %v80
    %v99 = vpop.permute.xlu0 %98
    %102 = vset.pattern.permute.xlu0 0
    %103 = vperm.xlu0 %102, %v81
    %v104 = vpop.permute.xlu0 %103
    %107 = vset.pattern.permute.xlu0 0
    %108 = vperm.xlu0 %107, %v82
    %v109 = vpop.permute.xlu0 %108
    %112 = vset.pattern.permute.xlu0 0
    %113 = vperm.xlu0 %112, %v83
    %v114 = vpop.permute.xlu0 %113
    %117 = vset.pattern.permute.xlu0 0
    %118 = vperm.xlu0 %117, %v84
    %v119 = vpop.permute.xlu0 %118
    %122 = vset.pattern.permute.xlu0 0
    %123 = vperm.xlu0 %122, %v85
    %v124 = vpop.permute.xlu0 %123
    %vm126 = vcmask 523264
    %v128 = vsel %vm126, %v70, 0
    %v131 = vsel %vm126, %v71, 0
    %v134 = vsel %vm126, %v72, 0
    %v137 = vsel %vm126, %v73, 0
    %v140 = vsel %vm126, %v74, 0
    %v143 = vsel %vm126, %v75, 0
    %v146 = vsel %vm126, %v76, 0
    %v149 = vsel %vm126, %v77, 0
    %151 = vmatpush.msra.mxu0 0.0
    %152 = vmatpush.msra.mxu0 0.0
    %153 = vmatpush.msra.mxu0 0.0
    %154 = vmatpush.msra.mxu0 0.0
    %155 = vmatpush.msra.mxu0 0.0
    %156 = vmatpush.msra.mxu0 0.0
    %157 = vmatpush.msra.mxu0 0.0
    %158 = vmatpush.msra.mxu0 0.0
    %159 = vmatpush.msra.mxu0 %v55
    %160 = vmatpush.msra.mxu0 %v52
    %161 = vmatpush.msra.mxu0 %v49
    %162 = vmatpush.msra.mxu0 %v46
    %163 = vmatpush.msra.mxu0 %v43
    %164 = vmatpush.msra.mxu0 %v40
    %165 = vmatpush.msra.mxu0 %v37
    %166 = vmatpush.msra.mxu0 %v34
    %167 = vmatmul.f32.gmra.mxu0 %v128
    %v168 = vpop.f32.mrf.mxu0
    %v169 = vadd.f32 %v89, %v168
    %170 = vmatmul.f32.gmra.mxu0 %v131
    %v171 = vpop.f32.mrf.mxu0
    %v172 = vadd.f32 %v94, %v171
    %173 = vmatmul.f32.gmra.mxu0 %v134
    %v174 = vpop.f32.mrf.mxu0
    %v175 = vadd.f32 %v99, %v174
    %176 = vmatmul.f32.gmra.mxu0 %v137
    %v177 = vpop.f32.mrf.mxu0
    %v178 = vadd.f32 %v104, %v177
    %179 = vmatmul.f32.gmra.mxu0 %v140
    %v180 = vpop.f32.mrf.mxu0
    %v181 = vadd.f32 %v109, %v180
    %182 = vmatmul.f32.gmra.mxu0 %v143
    %v183 = vpop.f32.mrf.mxu0
    %v184 = vadd.f32 %v114, %v183
    %185 = vmatmul.f32.gmra.mxu0 %v146
    %v186 = vpop.f32.mrf.mxu0
    %v187 = vadd.f32 %v119, %v186
    %188 = vmatmul.f32.gmra.mxu0 %v149
    %v189 = vpop.f32.mrf.mxu0
    %v190 = vadd.f32 %v124, %v189
    %191 = vdwg.mxu0
    %192 = vmatpush.msra.mxu0 0.0
    %193 = vmatpush.msra.mxu0 0.0
    %194 = vmatpush.msra.mxu0 0.0
    %195 = vmatpush.msra.mxu0 0.0
    %196 = vmatpush.msra.mxu0 0.0
    %197 = vmatpush.msra.mxu0 0.0
    %198 = vmatpush.msra.mxu0 0.0
    %199 = vmatpush.msra.mxu0 0.0
    %200 = vmatpush.msra.mxu0 %v56
    %201 = vmatpush.msra.mxu0 %v53
    %202 = vmatpush.msra.mxu0 %v50
    %203 = vmatpush.msra.mxu0 %v47
    %204 = vmatpush.msra.mxu0 %v44
    %205 = vmatpush.msra.mxu0 %v41
    %206 = vmatpush.msra.mxu0 %v38
    %207 = vmatpush.msra.mxu0 %v35
    %208 = vmatmul.f32.gmra.mxu0 %v128
    %v209 = vpop.f32.mrf.mxu0
    %v210 = vadd.f32 %v89, %v209
    %211 = vmatmul.f32.gmra.mxu0 %v131
    %v212 = vpop.f32.mrf.mxu0
    %v213 = vadd.f32 %v94, %v212
    %214 = vmatmul.f32.gmra.mxu0 %v134
    %v215 = vpop.f32.mrf.mxu0
    %v216 = vadd.f32 %v99, %v215
    %217 = vmatmul.f32.gmra.mxu0 %v137
    %v218 = vpop.f32.mrf.mxu0
    %v219 = vadd.f32 %v104, %v218
    %220 = vmatmul.f32.gmra.mxu0 %v140
    %v221 = vpop.f32.mrf.mxu0
    %v222 = vadd.f32 %v109, %v221
    %223 = vmatmul.f32.gmra.mxu0 %v143
    %v224 = vpop.f32.mrf.mxu0
    %v225 = vadd.f32 %v114, %v224
    %226 = vmatmul.f32.gmra.mxu0 %v146
    %v227 = vpop.f32.mrf.mxu0
    %v228 = vadd.f32 %v119, %v227
    %229 = vmatmul.f32.gmra.mxu0 %v149
    %v230 = vpop.f32.mrf.mxu0
    %v231 = vadd.f32 %v124, %v230
    %232 = vdwg.mxu0
    %233 = vmatpush.msra.mxu0 0.0
    %234 = vmatpush.msra.mxu0 0.0
    %235 = vmatpush.msra.mxu0 0.0
    %236 = vmatpush.msra.mxu0 0.0
    %237 = vmatpush.msra.mxu0 0.0
    %238 = vmatpush.msra.mxu0 0.0
    %239 = vmatpush.msra.mxu0 0.0
    %240 = vmatpush.msra.mxu0 0.0
    %241 = vmatpush.msra.mxu0 %v57
    %242 = vmatpush.msra.mxu0 %v54
    %243 = vmatpush.msra.mxu0 %v51
    %244 = vmatpush.msra.mxu0 %v48
    %245 = vmatpush.msra.mxu0 %v45
    %246 = vmatpush.msra.mxu0 %v42
    %247 = vmatpush.msra.mxu0 %v39
    %248 = vmatpush.msra.mxu0 %v36
    %249 = vmatmul.f32.gmra.mxu0 %v128
    %v250 = vpop.f32.mrf.mxu0
    %v251 = vadd.f32 %v89, %v250
    %252 = vmatmul.f32.gmra.mxu0 %v131
    %v253 = vpop.f32.mrf.mxu0
    %v254 = vadd.f32 %v94, %v253
    %255 = vmatmul.f32.gmra.mxu0 %v134
    %v256 = vpop.f32.mrf.mxu0
    %v257 = vadd.f32 %v99, %v256
    %258 = vmatmul.f32.gmra.mxu0 %v137
    %v259 = vpop.f32.mrf.mxu0
    %v260 = vadd.f32 %v104, %v259
    %261 = vmatmul.f32.gmra.mxu0 %v140
    %v262 = vpop.f32.mrf.mxu0
    %v263 = vadd.f32 %v109, %v262
    %264 = vmatmul.f32.gmra.mxu0 %v143
    %v265 = vpop.f32.mrf.mxu0
    %v266 = vadd.f32 %v114, %v265
    %267 = vmatmul.f32.gmra.mxu0 %v146
    %v268 = vpop.f32.mrf.mxu0
    %v269 = vadd.f32 %v119, %v268
    %270 = vmatmul.f32.gmra.mxu0 %v149
    %v271 = vpop.f32.mrf.mxu0
    %v272 = vadd.f32 %v124, %v271
    %273 = vdwg.mxu0
    %v274 = vmax.f32 %v169, 0.0
    %v275 = vmax.f32 %v210, 0.0
    %v276 = vmax.f32 %v251, 0.0
    %v277 = vmax.f32 %v172, 0.0
    %v278 = vmax.f32 %v213, 0.0
    %v279 = vmax.f32 %v254, 0.0
    %v280 = vmax.f32 %v175, 0.0
    %v281 = vmax.f32 %v216, 0.0
    %v282 = vmax.f32 %v257, 0.0
    %v283 = vmax.f32 %v178, 0.0
    %v284 = vmax.f32 %v219, 0.0
    %v285 = vmax.f32 %v260, 0.0
    %v286 = vmax.f32 %v181, 0.0
    %v287 = vmax.f32 %v222, 0.0
    %v288 = vmax.f32 %v263, 0.0
    %v289 = vmax.f32 %v184, 0.0
    %v290 = vmax.f32 %v225, 0.0
    %v291 = vmax.f32 %v266, 0.0
    %v292 = vmax.f32 %v187, 0.0
    %v293 = vmax.f32 %v228, 0.0
    %v294 = vmax.f32 %v269, 0.0
    %v295 = vmax.f32 %v190, 0.0
    %v296 = vmax.f32 %v231, 0.0
    %v297 = vmax.f32 %v272, 0.0
    %v298 = vadd.f32 %v34, %v274
    %v299 = vadd.f32 %v35, %v275
    %v300 = vadd.f32 %v36, %v276
    %v301 = vadd.f32 %v37, %v277
    %v302 = vadd.f32 %v38, %v278
    %v303 = vadd.f32 %v39, %v279
    %v304 = vadd.f32 %v40, %v280
    %v305 = vadd.f32 %v41, %v281
    %v306 = vadd.f32 %v42, %v282
    %v307 = vadd.f32 %v43, %v283
    %v308 = vadd.f32 %v44, %v284
    %v309 = vadd.f32 %v45, %v285
    %v310 = vadd.f32 %v46, %v286
    %v311 = vadd.f32 %v47, %v287
    %v312 = vadd.f32 %v48, %v288
    %v313 = vadd.f32 %v49, %v289
    %v314 = vadd.f32 %v50, %v290
    %v315 = vadd.f32 %v51, %v291
    %v316 = vadd.f32 %v52, %v292
    %v317 = vadd.f32 %v53, %v293
    %v318 = vadd.f32 %v54, %v294
    %v319 = vadd.f32 %v55, %v295
    %v320 = vadd.f32 %v56, %v296
    %v321 = vadd.f32 %v57, %v297
    %322 = vset.pattern.permute.xlu0 1
    %323 = vperm.xlu0 %322, %v78
    %v324 = vpop.permute.xlu0 %323
    %326 = vset.pattern.permute.xlu0 1
    %327 = vperm.xlu0 %326, %v79
    %v328 = vpop.permute.xlu0 %327
    %330 = vset.pattern.permute.xlu0 1
    %331 = vperm.xlu0 %330, %v80
    %v332 = vpop.permute.xlu0 %331
    %334 = vset.pattern.permute.xlu0 1
    %335 = vperm.xlu0 %334, %v81
    %v336 = vpop.permute.xlu0 %335
    %338 = vset.pattern.permute.xlu0 1
    %339 = vperm.xlu0 %338, %v82
    %v340 = vpop.permute.xlu0 %339
    %342 = vset.pattern.permute.xlu0 1
    %343 = vperm.xlu0 %342, %v83
    %v344 = vpop.permute.xlu0 %343
    %346 = vset.pattern.permute.xlu0 1
    %347 = vperm.xlu0 %346, %v84
    %v348 = vpop.permute.xlu0 %347
    %350 = vset.pattern.permute.xlu0 1
    %351 = vperm.xlu0 %350, %v85
    %v352 = vpop.permute.xlu0 %351
    %v354 = vmul.f32 %v298, %v324
    %v355 = vmul.f32 %v299, %v324
    %v356 = vmul.f32 %v300, %v324
    %v357 = vmul.f32 %v301, %v328
    %v358 = vmul.f32 %v302, %v328
    %v359 = vmul.f32 %v303, %v328
    %v360 = vmul.f32 %v304, %v332
    %v361 = vmul.f32 %v305, %v332
    %v362 = vmul.f32 %v306, %v332
    %v363 = vmul.f32 %v307, %v336
    %v364 = vmul.f32 %v308, %v336
    %v365 = vmul.f32 %v309, %v336
    %v366 = vmul.f32 %v310, %v340
    %v367 = vmul.f32 %v311, %v340
    %v368 = vmul.f32 %v312, %v340
    %v369 = vmul.f32 %v313, %v344
    %v370 = vmul.f32 %v314, %v344
    %v371 = vmul.f32 %v315, %v344
    %v372 = vmul.f32 %v316, %v348
    %v373 = vmul.f32 %v317, %v348
    %v374 = vmul.f32 %v318, %v348
    %v375 = vmul.f32 %v319, %v352
    %v376 = vmul.f32 %v320, %v352
    %v377 = vmul.f32 %v321, %v352
    %378 = vset.pattern.permute.xlu0 2
    %379 = vperm.xlu0 %378, %v78
    %v380 = vpop.permute.xlu0 %379
    %382 = vset.pattern.permute.xlu0 2
    %383 = vperm.xlu0 %382, %v79
    %v384 = vpop.permute.xlu0 %383
    %386 = vset.pattern.permute.xlu0 2
    %387 = vperm.xlu0 %386, %v80
    %v388 = vpop.permute.xlu0 %387
    %390 = vset.pattern.permute.xlu0 2
    %391 = vperm.xlu0 %390, %v81
    %v392 = vpop.permute.xlu0 %391
    %394 = vset.pattern.permute.xlu0 2
    %395 = vperm.xlu0 %394, %v82
    %v396 = vpop.permute.xlu0 %395
    %398 = vset.pattern.permute.xlu0 2
    %399 = vperm.xlu0 %398, %v83
    %v400 = vpop.permute.xlu0 %399
    %402 = vset.pattern.permute.xlu0 2
    %403 = vperm.xlu0 %402, %v84
    %v404 = vpop.permute.xlu0 %403
    %406 = vset.pattern.permute.xlu0 2
    %407 = vperm.xlu0 %406, %v85
    %v408 = vpop.permute.xlu0 %407
    %v410 = vadd.f32 %v354, %v380
    %v411 = vadd.f32 %v355, %v380
    %v412 = vadd.f32 %v356, %v380
    %v413 = vadd.f32 %v357, %v384
    %v414 = vadd.f32 %v358, %v384
    %v415 = vadd.f32 %v359, %v384
    %v416 = vadd.f32 %v360, %v388
    %v417 = vadd.f32 %v361, %v388
    %v418 = vadd.f32 %v362, %v388
    %v419 = vadd.f32 %v363, %v392
    %v420 = vadd.f32 %v364, %v392
    %v421 = vadd.f32 %v365, %v392
    %v422 = vadd.f32 %v366, %v396
    %v423 = vadd.f32 %v367, %v396
    %v424 = vadd.f32 %v368, %v396
    %v425 = vadd.f32 %v369, %v400
    %v426 = vadd.f32 %v370, %v400
    %v427 = vadd.f32 %v371, %v400
    %v428 = vadd.f32 %v372, %v404
    %v429 = vadd.f32 %v373, %v404
    %v430 = vadd.f32 %v374, %v404
    %v431 = vadd.f32 %v375, %v408
    %v432 = vadd.f32 %v376, %v408
    %v433 = vadd.f32 %v377, %v408
    %v434 = vld [vmem:[#allocation2 + $0x40] sm:$0xff]
    %v435 = vld [vmem:[#allocation2 + $0x48] sm:$0xff]
    %v436 = vld [vmem:[#allocation2 + $0x50] sm:$0xff]
    %v437 = vld [vmem:[#allocation2 + $0x58] sm:$0xff]
    %v438 = vld [vmem:[#allocation2 + $0x60] sm:$0xff]
    %v439 = vld [vmem:[#allocation2 + $0x68] sm:$0xff]
    %v440 = vld [vmem:[#allocation2 + $0x70] sm:$0xff]
    %v441 = vld [vmem:[#allocation2 + $0x78] sm:$0xff]
    %v442 = vld [vmem:[#allocation2 + $0x80] sm:$0xff]
    %v443 = vld [vmem:[#allocation2 + $0x88] sm:$0xff]
    %v444 = vld [vmem:[#allocation2 + $0x90] sm:$0xff]
    %v445 = vld [vmem:[#allocation2 + $0x98] sm:$0xff]
    %v446 = vld [vmem:[#allocation2 + $0xa0] sm:$0xff]
    %v447 = vld [vmem:[#allocation2 + $0xa8] sm:$0xff]
    %v448 = vld [vmem:[#allocation2 + $0xb0] sm:$0xff]
    %v449 = vld [vmem:[#allocation2 + $0xb8] sm:$0xff]
    %v450 = vld [vmem:[#allocation2 + $0xc0] sm:$0xff]
    %v451 = vld [vmem:[#allocation2 + $0xc8] sm:$0xff]
    %v452 = vld [vmem:[#allocation2 + $0xd0] sm:$0xff]
    %v453 = vld [vmem:[#allocation2 + $0xd8] sm:$0xff]
    %v454 = vld [vmem:[#allocation2 + $0xe0] sm:$0xff]
    %v455 = vld [vmem:[#allocation2 + $0xe8] sm:$0xff]
    %v456 = vld [vmem:[#allocation2 + $0xf0] sm:$0xff]
    %v457 = vld [vmem:[#allocation2 + $0xf8] sm:$0xff]
    %v458 = vld [vmem:[#allocation2 + $0x100] sm:$0xff]
    %v459 = vld [vmem:[#allocation2 + $0x108] sm:$0xff]
    %v460 = vld [vmem:[#allocation2 + $0x110] sm:$0xff]
    %v461 = vld [vmem:[#allocation2 + $0x118] sm:$0xff]
    %v462 = vld [vmem:[#allocation2 + $0x120] sm:$0xff]
    %v463 = vld [vmem:[#allocation2 + $0x128] sm:$0xff]
    %v464 = vld [vmem:[#allocation2 + $0x130] sm:$0xff]
    %v465 = vld [vmem:[#allocation2 + $0x138] sm:$0xff]
    %vm466 = vcmask 261120
    %v468 = vsel %vm466, %v434, 0
    %v471 = vsel %vm466, %v435, 0
    %v474 = vsel %vm466, %v436, 0
    %v477 = vsel %vm466, %v437, 0
    %v480 = vsel %vm466, %v438, 0
    %v483 = vsel %vm466, %v439, 0
    %v486 = vsel %vm466, %v440, 0
    %v489 = vsel %vm466, %v441, 0
    %v492 = vsel %vm466, %v442, 0
    %v495 = vsel %vm466, %v443, 0
    %v498 = vsel %vm466, %v444, 0
    %v501 = vsel %vm466, %v445, 0
    %v504 = vsel %vm466, %v446, 0
    %v507 = vsel %vm466, %v447, 0
    %v510 = vsel %vm466, %v448, 0
    %v513 = vsel %vm466, %v449, 0
    %v516 = vsel %vm466, %v450, 0
    %v519 = vsel %vm466, %v451, 0
    %v522 = vsel %vm466, %v452, 0
    %v525 = vsel %vm466, %v453, 0
    %v528 = vsel %vm466, %v454, 0
    %v531 = vsel %vm466, %v455, 0
    %v534 = vsel %vm466, %v456, 0
    %v537 = vsel %vm466, %v457, 0
    %v540 = vsel %vm466, %v458, 0
    %v543 = vsel %vm466, %v459, 0
    %v546 = vsel %vm466, %v460, 0
    %v549 = vsel %vm466, %v461, 0
    %v552 = vsel %vm466, %v462, 0
    %v555 = vsel %vm466, %v463, 0
    %v558 = vsel %vm466, %v464, 0
    %v561 = vsel %vm466, %v465, 0
    %563 = vmatpush.msra.mxu0 0.0
    %564 = vmatpush.msra.mxu0 0.0
    %565 = vmatpush.msra.mxu0 0.0
    %566 = vmatpush.msra.mxu0 0.0
    %567 = vmatpush.msra.mxu0 0.0
    %568 = vmatpush.msra.mxu0 0.0
    %569 = vmatpush.msra.mxu0 0.0
    %570 = vmatpush.msra.mxu0 0.0
    %571 = vmatpush.msra.mxu0 0.0
    %572 = vmatpush.msra.mxu0 0.0
    %573 = vmatpush.msra.mxu0 0.0
    %574 = vmatpush.msra.mxu0 0.0
    %575 = vmatpush.msra.mxu0 %v67
    %576 = vmatpush.msra.mxu0 %v64
    %577 = vmatpush.msra.mxu0 %v61
    %578 = vmatpush.msra.mxu0 %v58
    %579 = vmatmul.f32.gmra.mxu0 %v468
    %v580 = vpop.f32.mrf.mxu0
    %v581 = vadd.f32 0.0, %v580
    %582 = vmatmul.f32.gmra.mxu0 %v471
    %v583 = vpop.f32.mrf.mxu0
    %v584 = vadd.f32 0.0, %v583
    %585 = vmatmul.f32.gmra.mxu0 %v474
    %v586 = vpop.f32.mrf.mxu0
    %v587 = vadd.f32 0.0, %v586
    %588 = vmatmul.f32.gmra.mxu0 %v477
    %v589 = vpop.f32.mrf.mxu0
    %v590 = vadd.f32 0.0, %v589
    %591 = vmatmul.f32.gmra.mxu0 %v480
    %v592 = vpop.f32.mrf.mxu0
    %v593 = vadd.f32 0.0, %v592
    %594 = vmatmul.f32.gmra.mxu0 %v483
    %v595 = vpop.f32.mrf.mxu0
    %v596 = vadd.f32 0.0, %v595
    %597 = vmatmul.f32.gmra.mxu0 %v486
    %v598 = vpop.f32.mrf.mxu0
    %v599 = vadd.f32 0.0, %v598
    %600 = vmatmul.f32.gmra.mxu0 %v489
    %v601 = vpop.f32.mrf.mxu0
    %v602 = vadd.f32 0.0, %v601
    %603 = vmatmul.f32.gmra.mxu0 %v492
    %v604 = vpop.f32.mrf.mxu0
    %v605 = vadd.f32 0.0, %v604
    %606 = vmatmul.f32.gmra.mxu0 %v495
    %v607 = vpop.f32.mrf.mxu0
    %v608 = vadd.f32 0.0, %v607
    %609 = vmatmul.f32.gmra.mxu0 %v498
    %v610 = vpop.f32.mrf.mxu0
    %v611 = vadd.f32 0.0, %v610
    %612 = vmatmul.f32.gmra.mxu0 %v501
    %v613 = vpop.f32.mrf.mxu0
    %v614 = vadd.f32 0.0, %v613
    %615 = vmatmul.f32.gmra.mxu0 %v504
    %v616 = vpop.f32.mrf.mxu0
    %v617 = vadd.f32 0.0, %v616
    %618 = vmatmul.f32.gmra.mxu0 %v507
    %v619 = vpop.f32.mrf.mxu0
    %v620 = vadd.f32 0.0, %v619
    %621 = vmatmul.f32.gmra.mxu0 %v510
    %v622 = vpop.f32.mrf.mxu0
    %v623 = vadd.f32 0.0, %v622
    %624 = vmatmul.f32.gmra.mxu0 %v513
    %v625 = vpop.f32.mrf.mxu0
    %v626 = vadd.f32 0.0, %v625
    %627 = vmatmul.f32.gmra.mxu0 %v516
    %v628 = vpop.f32.mrf.mxu0
    %v629 = vadd.f32 0.0, %v628
    %630 = vmatmul.f32.gmra.mxu0 %v519
    %v631 = vpop.f32.mrf.mxu0
    %v632 = vadd.f32 0.0, %v631
    %633 = vmatmul.f32.gmra.mxu0 %v522
    %v634 = vpop.f32.mrf.mxu0
    %v635 = vadd.f32 0.0, %v634
    %636 = vmatmul.f32.gmra.mxu0 %v525
    %v637 = vpop.f32.mrf.mxu0
    %v638 = vadd.f32 0.0, %v637
    %639 = vmatmul.f32.gmra.mxu0 %v528
    %v640 = vpop.f32.mrf.mxu0
    %v641 = vadd.f32 0.0, %v640
    %642 = vmatmul.f32.gmra.mxu0 %v531
    %v643 = vpop.f32.mrf.mxu0
    %v644 = vadd.f32 0.0, %v643
    %645 = vmatmul.f32.gmra.mxu0 %v534
    %v646 = vpop.f32.mrf.mxu0
    %v647 = vadd.f32 0.0, %v646
    %648 = vmatmul.f32.gmra.mxu0 %v537
    %v649 = vpop.f32.mrf.mxu0
    %v650 = vadd.f32 0.0, %v649
    %651 = vmatmul.f32.gmra.mxu0 %v540
    %v652 = vpop.f32.mrf.mxu0
    %v653 = vadd.f32 0.0, %v652
    %654 = vmatmul.f32.gmra.mxu0 %v543
    %v655 = vpop.f32.mrf.mxu0
    %v656 = vadd.f32 0.0, %v655
    %657 = vmatmul.f32.gmra.mxu0 %v546
    %v658 = vpop.f32.mrf.mxu0
    %v659 = vadd.f32 0.0, %v658
    %660 = vmatmul.f32.gmra.mxu0 %v549
    %v661 = vpop.f32.mrf.mxu0
    %v662 = vadd.f32 0.0, %v661
    %663 = vmatmul.f32.gmra.mxu0 %v552
    %v664 = vpop.f32.mrf.mxu0
    %v665 = vadd.f32 0.0, %v664
    %666 = vmatmul.f32.gmra.mxu0 %v555
    %v667 = vpop.f32.mrf.mxu0
    %v668 = vadd.f32 0.0, %v667
    %669 = vmatmul.f32.gmra.mxu0 %v558
    %v670 = vpop.f32.mrf.mxu0
    %v671 = vadd.f32 0.0, %v670
    %672 = vmatmul.f32.gmra.mxu0 %v561
    %v673 = vpop.f32.mrf.mxu0
    %v674 = vadd.f32 0.0, %v673
    %675 = vdwg.mxu0
    %676 = vmatpush.msra.mxu0 0.0
    %677 = vmatpush.msra.mxu0 0.0
    %678 = vmatpush.msra.mxu0 0.0
    %679 = vmatpush.msra.mxu0 0.0
    %680 = vmatpush.msra.mxu0 0.0
    %681 = vmatpush.msra.mxu0 0.0
    %682 = vmatpush.msra.mxu0 0.0
    %683 = vmatpush.msra.mxu0 0.0
    %684 = vmatpush.msra.mxu0 0.0
    %685 = vmatpush.msra.mxu0 0.0
    %686 = vmatpush.msra.mxu0 0.0
    %687 = vmatpush.msra.mxu0 0.0
    %688 = vmatpush.msra.mxu0 %v68
    %689 = vmatpush.msra.mxu0 %v65
    %690 = vmatpush.msra.mxu0 %v62
    %691 = vmatpush.msra.mxu0 %v59
    %692 = vmatmul.f32.gmra.mxu0 %v468
    %v693 = vpop.f32.mrf.mxu0
    %v694 = vadd.f32 0.0, %v693
    %695 = vmatmul.f32.gmra.mxu0 %v471
    %v696 = vpop.f32.mrf.mxu0
    %v697 = vadd.f32 0.0, %v696
    %698 = vmatmul.f32.gmra.mxu0 %v474
    %v699 = vpop.f32.mrf.mxu0
    %v700 = vadd.f32 0.0, %v699
    %701 = vmatmul.f32.gmra.mxu0 %v477
    %v702 = vpop.f32.mrf.mxu0
    %v703 = vadd.f32 0.0, %v702
    %704 = vmatmul.f32.gmra.mxu0 %v480
    %v705 = vpop.f32.mrf.mxu0
    %v706 = vadd.f32 0.0, %v705
    %707 = vmatmul.f32.gmra.mxu0 %v483
    %v708 = vpop.f32.mrf.mxu0
    %v709 = vadd.f32 0.0, %v708
    %710 = vmatmul.f32.gmra.mxu0 %v486
    %v711 = vpop.f32.mrf.mxu0
    %v712 = vadd.f32 0.0, %v711
    %713 = vmatmul.f32.gmra.mxu0 %v489
    %v714 = vpop.f32.mrf.mxu0
    %v715 = vadd.f32 0.0, %v714
    %716 = vmatmul.f32.gmra.mxu0 %v492
    %v717 = vpop.f32.mrf.mxu0
    %v718 = vadd.f32 0.0, %v717
    %719 = vmatmul.f32.gmra.mxu0 %v495
    %v720 = vpop.f32.mrf.mxu0
    %v721 = vadd.f32 0.0, %v720
    %722 = vmatmul.f32.gmra.mxu0 %v498
    %v723 = vpop.f32.mrf.mxu0
    %v724 = vadd.f32 0.0, %v723
    %725 = vmatmul.f32.gmra.mxu0 %v501
    %v726 = vpop.f32.mrf.mxu0
    %v727 = vadd.f32 0.0, %v726
    %728 = vmatmul.f32.gmra.mxu0 %v504
    %v729 = vpop.f32.mrf.mxu0
    %v730 = vadd.f32 0.0, %v729
    %731 = vmatmul.f32.gmra.mxu0 %v507
    %v732 = vpop.f32.mrf.mxu0
    %v733 = vadd.f32 0.0, %v732
    %734 = vmatmul.f32.gmra.mxu0 %v510
    %v735 = vpop.f32.mrf.mxu0
    %v736 = vadd.f32 0.0, %v735
    %737 = vmatmul.f32.gmra.mxu0 %v513
    %v738 = vpop.f32.mrf.mxu0
    %v739 = vadd.f32 0.0, %v738
    %740 = vmatmul.f32.gmra.mxu0 %v516
    %v741 = vpop.f32.mrf.mxu0
    %v742 = vadd.f32 0.0, %v741
    %743 = vmatmul.f32.gmra.mxu0 %v519
    %v744 = vpop.f32.mrf.mxu0
    %v745 = vadd.f32 0.0, %v744
    %746 = vmatmul.f32.gmra.mxu0 %v522
    %v747 = vpop.f32.mrf.mxu0
    %v748 = vadd.f32 0.0, %v747
    %749 = vmatmul.f32.gmra.mxu0 %v525
    %v750 = vpop.f32.mrf.mxu0
    %v751 = vadd.f32 0.0, %v750
    %752 = vmatmul.f32.gmra.mxu0 %v528
    %v753 = vpop.f32.mrf.mxu0
    %v754 = vadd.f32 0.0, %v753
    %755 = vmatmul.f32.gmra.mxu0 %v531
    %v756 = vpop.f32.mrf.mxu0
    %v757 = vadd.f32 0.0, %v756
    %758 = vmatmul.f32.gmra.mxu0 %v534
    %v759 = vpop.f32.mrf.mxu0
    %v760 = vadd.f32 0.0, %v759
    %761 = vmatmul.f32.gmra.mxu0 %v537
    %v762 = vpop.f32.mrf.mxu0
    %v763 = vadd.f32 0.0, %v762
    %764 = vmatmul.f32.gmra.mxu0 %v540
    %v765 = vpop.f32.mrf.mxu0
    %v766 = vadd.f32 0.0, %v765
    %767 = vmatmul.f32.gmra.mxu0 %v543
    %v768 = vpop.f32.mrf.mxu0
    %v769 = vadd.f32 0.0, %v768
    %770 = vmatmul.f32.gmra.mxu0 %v546
    %v771 = vpop.f32.mrf.mxu0
    %v772 = vadd.f32 0.0, %v771
    %773 = vmatmul.f32.gmra.mxu0 %v549
    %v774 = vpop.f32.mrf.mxu0
    %v775 = vadd.f32 0.0, %v774
    %776 = vmatmul.f32.gmra.mxu0 %v552
    %v777 = vpop.f32.mrf.mxu0
    %v778 = vadd.f32 0.0, %v777
    %779 = vmatmul.f32.gmra.mxu0 %v555
    %v780 = vpop.f32.mrf.mxu0
    %v781 = vadd.f32 0.0, %v780
    %782 = vmatmul.f32.gmra.mxu0 %v558
    %v783 = vpop.f32.mrf.mxu0
    %v784 = vadd.f32 0.0, %v783
    %785 = vmatmul.f32.gmra.mxu0 %v561
    %v786 = vpop.f32.mrf.mxu0
    %v787 = vadd.f32 0.0, %v786
    %788 = vdwg.mxu0
    %789 = vmatpush.msra.mxu0 0.0
    %790 = vmatpush.msra.mxu0 0.0
    %791 = vmatpush.msra.mxu0 0.0
    %792 = vmatpush.msra.mxu0 0.0
    %793 = vmatpush.msra.mxu0 0.0
    %794 = vmatpush.msra.mxu0 0.0
    %795 = vmatpush.msra.mxu0 0.0
    %796 = vmatpush.msra.mxu0 0.0
    %797 = vmatpush.msra.mxu0 0.0
    %798 = vmatpush.msra.mxu0 0.0
    %799 = vmatpush.msra.mxu0 0.0
    %800 = vmatpush.msra.mxu0 0.0
    %801 = vmatpush.msra.mxu0 %v69
    %802 = vmatpush.msra.mxu0 %v66
    %803 = vmatpush.msra.mxu0 %v63
    %804 = vmatpush.msra.mxu0 %v60
    %805 = vmatmul.f32.gmra.mxu0 %v468
    %v806 = vpop.f32.mrf.mxu0
    %v807 = vadd.f32 0.0, %v806
    %808 = vmatmul.f32.gmra.mxu0 %v471
    %v809 = vpop.f32.mrf.mxu0
    %v810 = vadd.f32 0.0, %v809
    %811 = vmatmul.f32.gmra.mxu0 %v474
    %v812 = vpop.f32.mrf.mxu0
    %v813 = vadd.f32 0.0, %v812
    %814 = vmatmul.f32.gmra.mxu0 %v477
    %v815 = vpop.f32.mrf.mxu0
    %v816 = vadd.f32 0.0, %v815
    %817 = vmatmul.f32.gmra.mxu0 %v480
    %v818 = vpop.f32.mrf.mxu0
    %v819 = vadd.f32 0.0, %v818
    %820 = vmatmul.f32.gmra.mxu0 %v483
    %v821 = vpop.f32.mrf.mxu0
    %v822 = vadd.f32 0.0, %v821
    %823 = vmatmul.f32.gmra.mxu0 %v486
    %v824 = vpop.f32.mrf.mxu0
    %v825 = vadd.f32 0.0, %v824
    %826 = vmatmul.f32.gmra.mxu0 %v489
    %v827 = vpop.f32.mrf.mxu0
    %v828 = vadd.f32 0.0, %v827
    %829 = vmatmul.f32.gmra.mxu0 %v492
    %v830 = vpop.f32.mrf.mxu0
    %v831 = vadd.f32 0.0, %v830
    %832 = vmatmul.f32.gmra.mxu0 %v495
    %v833 = vpop.f32.mrf.mxu0
    %v834 = vadd.f32 0.0, %v833
    %835 = vmatmul.f32.gmra.mxu0 %v498
    %v836 = vpop.f32.mrf.mxu0
    %v837 = vadd.f32 0.0, %v836
    %838 = vmatmul.f32.gmra.mxu0 %v501
    %v839 = vpop.f32.mrf.mxu0
    %v840 = vadd.f32 0.0, %v839
    %841 = vmatmul.f32.gmra.mxu0 %v504
    %v842 = vpop.f32.mrf.mxu0
    %v843 = vadd.f32 0.0, %v842
    %844 = vmatmul.f32.gmra.mxu0 %v507
    %v845 = vpop.f32.mrf.mxu0
    %v846 = vadd.f32 0.0, %v845
    %847 = vmatmul.f32.gmra.mxu0 %v510
    %v848 = vpop.f32.mrf.mxu0
    %v849 = vadd.f32 0.0, %v848
    %850 = vmatmul.f32.gmra.mxu0 %v513
    %v851 = vpop.f32.mrf.mxu0
    %v852 = vadd.f32 0.0, %v851
    %853 = vmatmul.f32.gmra.mxu0 %v516
    %v854 = vpop.f32.mrf.mxu0
    %v855 = vadd.f32 0.0, %v854
    %856 = vmatmul.f32.gmra.mxu0 %v519
    %v857 = vpop.f32.mrf.mxu0
    %v858 = vadd.f32 0.0, %v857
    %859 = vmatmul.f32.gmra.mxu0 %v522
    %v860 = vpop.f32.mrf.mxu0
    %v861 = vadd.f32 0.0, %v860
    %862 = vmatmul.f32.gmra.mxu0 %v525
    %v863 = vpop.f32.mrf.mxu0
    %v864 = vadd.f32 0.0, %v863
    %865 = vmatmul.f32.gmra.mxu0 %v528
    %v866 = vpop.f32.mrf.mxu0
    %v867 = vadd.f32 0.0, %v866
    %868 = vmatmul.f32.gmra.mxu0 %v531
    %v869 = vpop.f32.mrf.mxu0
    %v870 = vadd.f32 0.0, %v869
    %871 = vmatmul.f32.gmra.mxu0 %v534
    %v872 = vpop.f32.mrf.mxu0
    %v873 = vadd.f32 0.0, %v872
    %874 = vmatmul.f32.gmra.mxu0 %v537
    %v875 = vpop.f32.mrf.mxu0
    %v876 = vadd.f32 0.0, %v875
    %877 = vmatmul.f32.gmra.mxu0 %v540
    %v878 = vpop.f32.mrf.mxu0
    %v879 = vadd.f32 0.0, %v878
    %880 = vmatmul.f32.gmra.mxu0 %v543
    %v881 = vpop.f32.mrf.mxu0
    %v882 = vadd.f32 0.0, %v881
    %883 = vmatmul.f32.gmra.mxu0 %v546
    %v884 = vpop.f32.mrf.mxu0
    %v885 = vadd.f32 0.0, %v884
    %886 = vmatmul.f32.gmra.mxu0 %v549
    %v887 = vpop.f32.mrf.mxu0
    %v888 = vadd.f32 0.0, %v887
    %889 = vmatmul.f32.gmra.mxu0 %v552
    %v890 = vpop.f32.mrf.mxu0
    %v891 = vadd.f32 0.0, %v890
    %892 = vmatmul.f32.gmra.mxu0 %v555
    %v893 = vpop.f32.mrf.mxu0
    %v894 = vadd.f32 0.0, %v893
    %895 = vmatmul.f32.gmra.mxu0 %v558
    %v896 = vpop.f32.mrf.mxu0
    %v897 = vadd.f32 0.0, %v896
    %898 = vmatmul.f32.gmra.mxu0 %v561
    %v899 = vpop.f32.mrf.mxu0
    %v900 = vadd.f32 0.0, %v899
    %901 = vdwg.mxu0
    %v902 = vld [vmem:[%s3] sm:$0xff]
    %v903 = vld [vmem:[%s3 + $0x8] sm:$0xff]
    %v904 = vld [vmem:[%s3 + $0x10] sm:$0xff]
    %v905 = vld [vmem:[%s3 + $0x18] sm:$0xff]
    %v906 = vld [vmem:[%s3 + $0x20] sm:$0xff]
    %v907 = vld [vmem:[%s3 + $0x28] sm:$0xff]
    %v908 = vld [vmem:[%s3 + $0x30] sm:$0xff]
    %v909 = vld [vmem:[%s3 + $0x38] sm:$0xff]
    %v910 = vld [vmem:[%s3 + $0x40] sm:$0xff]
    %v911 = vld [vmem:[%s3 + $0x48] sm:$0xff]
    %v912 = vld [vmem:[%s3 + $0x50] sm:$0xff]
    %v913 = vld [vmem:[%s3 + $0x58] sm:$0xff]
    %v914 = vld [vmem:[%s3 + $0x60] sm:$0xff]
    %v915 = vld [vmem:[%s3 + $0x68] sm:$0xff]
    %v916 = vld [vmem:[%s3 + $0x70] sm:$0xff]
    %v917 = vld [vmem:[%s3 + $0x78] sm:$0xff]
    %919 = vset.pattern.permute.xlu0 3
    %920 = vperm.xlu0 %919, %v902
    %v921 = vpop.permute.xlu0 %920
    %924 = vset.pattern.permute.xlu0 3
    %925 = vperm.xlu0 %924, %v903
    %v926 = vpop.permute.xlu0 %925
    %929 = vset.pattern.permute.xlu0 3
    %930 = vperm.xlu0 %929, %v904
    %v931 = vpop.permute.xlu0 %930
    %934 = vset.pattern.permute.xlu0 3
    %935 = vperm.xlu0 %934, %v905
    %v936 = vpop.permute.xlu0 %935
    %939 = vset.pattern.permute.xlu0 3
    %940 = vperm.xlu0 %939, %v906
    %v941 = vpop.permute.xlu0 %940
    %944 = vset.pattern.permute.xlu0 3
    %945 = vperm.xlu0 %944, %v907
    %v946 = vpop.permute.xlu0 %945
    %949 = vset.pattern.permute.xlu0 3
    %950 = vperm.xlu0 %949, %v908
    %v951 = vpop.permute.xlu0 %950
    %954 = vset.pattern.permute.xlu0 3
    %955 = vperm.xlu0 %954, %v909
    %v956 = vpop.permute.xlu0 %955
    %959 = vset.pattern.permute.xlu0 3
    %960 = vperm.xlu0 %959, %v910
    %v961 = vpop.permute.xlu0 %960
    %964 = vset.pattern.permute.xlu0 3
    %965 = vperm.xlu0 %964, %v911
    %v966 = vpop.permute.xlu0 %965
    %969 = vset.pattern.permute.xlu0 3
    %970 = vperm.xlu0 %969, %v912
    %v971 = vpop.permute.xlu0 %970
    %974 = vset.pattern.permute.xlu0 3
    %975 = vperm.xlu0 %974, %v913
    %v976 = vpop.permute.xlu0 %975
    %979 = vset.pattern.permute.xlu0 3
    %980 = vperm.xlu0 %979, %v914
    %v981 = vpop.permute.xlu0 %980
    %984 = vset.pattern.permute.xlu0 3
    %985 = vperm.xlu0 %984, %v915
    %v986 = vpop.permute.xlu0 %985
    %989 = vset.pattern.permute.xlu0 3
    %990 = vperm.xlu0 %989, %v916
    %v991 = vpop.permute.xlu0 %990
    %994 = vset.pattern.permute.xlu0 3
    %995 = vperm.xlu0 %994, %v917
    %v996 = vpop.permute.xlu0 %995
    %v998 = vadd.f32 %v581, %v921
    %v999 = vadd.f32 %v694, %v921
    %v1000 = vadd.f32 %v807, %v921
    %v1001 = vadd.f32 %v584, %v926
    %v1002 = vadd.f32 %v697, %v926
    %v1003 = vadd.f32 %v810, %v926
    %v1004 = vadd.f32 %v587, %v931
    %v1005 = vadd.f32 %v700, %v931
    %v1006 = vadd.f32 %v813, %v931
    %v1007 = vadd.f32 %v590, %v936
    %v1008 = vadd.f32 %v703, %v936
    %v1009 = vadd.f32 %v816, %v936
    %v1010 = vadd.f32 %v593, %v941
    %v1011 = vadd.f32 %v706, %v941
    %v1012 = vadd.f32 %v819, %v941
    %v1013 = vadd.f32 %v596, %v946
    %v1014 = vadd.f32 %v709, %v946
    %v1015 = vadd.f32 %v822, %v946
    %v1016 = vadd.f32 %v599, %v951
    %v1017 = vadd.f32 %v712, %v951
    %v1018 = vadd.f32 %v825, %v951
    %v1019 = vadd.f32 %v602, %v956
    %v1020 = vadd.f32 %v715, %v956
    %v1021 = vadd.f32 %v828, %v956
    %v1022 = vadd.f32 %v605, %v961
    %v1023 = vadd.f32 %v718, %v961
    %v1024 = vadd.f32 %v831, %v961
    %v1025 = vadd.f32 %v608, %v966
    %v1026 = vadd.f32 %v721, %v966
    %v1027 = vadd.f32 %v834, %v966
    %v1028 = vadd.f32 %v611, %v971
    %v1029 = vadd.f32 %v724, %v971
    %v1030 = vadd.f32 %v837, %v971
    %v1031 = vadd.f32 %v614, %v976
    %v1032 = vadd.f32 %v727, %v976
    %v1033 = vadd.f32 %v840, %v976
    %v1034 = vadd.f32 %v617, %v981
    %v1035 = vadd.f32 %v730, %v981
    %v1036 = vadd.f32 %v843, %v981
    %v1037 = vadd.f32 %v620, %v986
    %v1038 = vadd.f32 %v733, %v986
    %v1039 = vadd.f32 %v846, %v986
    %v1040 = vadd.f32 %v623, %v991
    %v1041 = vadd.f32 %v736, %v991
    %v1042 = vadd.f32 %v849, %v991
    %v1043 = vadd.f32 %v626, %v996
    %v1044 = vadd.f32 %v739, %v996
    %v1045 = vadd.f32 %v852, %v996
    %v1046 = vmax.f32 %v998, 0.0
    %v1047 = vmax.f32 %v999, 0.0
    %v1048 = vmax.f32 %v1000, 0.0
    %v1049 = vmax.f32 %v1001, 0.0
    %v1050 = vmax.f32 %v1002, 0.0
    %v1051 = vmax.f32 %v1003, 0.0
    %v1052 = vmax.f32 %v1004, 0.0
    %v1053 = vmax.f32 %v1005, 0.0
    %v1054 = vmax.f32 %v1006, 0.0
    %v1055 = vmax.f32 %v1007, 0.0
    %v1056 = vmax.f32 %v1008, 0.0
    %v1057 = vmax.f32 %v1009, 0.0
    %v1058 = vmax.f32 %v1010, 0.0
    %v1059 = vmax.f32 %v1011, 0.0
    %v1060 = vmax.f32 %v1012, 0.0
    %v1061 = vmax.f32 %v1013, 0.0
    %v1062 = vmax.f32 %v1014, 0.0
    %v1063 = vmax.f32 %v1015, 0.0
    %v1064 = vmax.f32 %v1016, 0.0
    %v1065 = vmax.f32 %v1017, 0.0
    %v1066 = vmax.f32 %v1018, 0.0
    %v1067 = vmax.f32 %v1019, 0.0
    %v1068 = vmax.f32 %v1020, 0.0
    %v1069 = vmax.f32 %v1021, 0.0
    %v1070 = vmax.f32 %v1022, 0.0
    %v1071 = vmax.f32 %v1023, 0.0
    %v1072 = vmax.f32 %v1024, 0.0
    %v1073 = vmax.f32 %v1025, 0.0
    %v1074 = vmax.f32 %v1026, 0.0
    %v1075 = vmax.f32 %v1027, 0.0
    %v1076 = vmax.f32 %v1028, 0.0
    %v1077 = vmax.f32 %v1029, 0.0
    %v1078 = vmax.f32 %v1030, 0.0
    %v1079 = vmax.f32 %v1031, 0.0
    %v1080 = vmax.f32 %v1032, 0.0
    %v1081 = vmax.f32 %v1033, 0.0
    %v1082 = vmax.f32 %v1034, 0.0
    %v1083 = vmax.f32 %v1035, 0.0
    %v1084 = vmax.f32 %v1036, 0.0
    %v1085 = vmax.f32 %v1037, 0.0
    %v1086 = vmax.f32 %v1038, 0.0
    %v1087 = vmax.f32 %v1039, 0.0
    %v1088 = vmax.f32 %v1040, 0.0
    %v1089 = vmax.f32 %v1041, 0.0
    %v1090 = vmax.f32 %v1042, 0.0
    %v1091 = vmax.f32 %v1043, 0.0
    %v1092 = vmax.f32 %v1044, 0.0
    %v1093 = vmax.f32 %v1045, 0.0
    %v1094 = vld [vmem:[#allocation2 + $0x140] sm:$0xff]
    %v1095 = vld [vmem:[#allocation2 + $0x148] sm:$0xff]
    %v1096 = vld [vmem:[#allocation2 + $0x150] sm:$0xff]
    %v1097 = vld [vmem:[#allocation2 + $0x158] sm:$0xff]
    %v1098 = vld [vmem:[#allocation2 + $0x160] sm:$0xff]
    %v1099 = vld [vmem:[#allocation2 + $0x168] sm:$0xff]
    %v1100 = vld [vmem:[#allocation2 + $0x170] sm:$0xff]
    %v1101 = vld [vmem:[#allocation2 + $0x178] sm:$0xff]
    %v1102 = vld [vmem:[#allocation2 + $0x180] sm:$0xff]
    %v1103 = vld [vmem:[#allocation2 + $0x188] sm:$0xff]
    %v1104 = vld [vmem:[#allocation2 + $0x190] sm:$0xff]
    %v1105 = vld [vmem:[#allocation2 + $0x198] sm:$0xff]
    %v1106 = vld [vmem:[#allocation2 + $0x1a0] sm:$0xff]
    %v1107 = vld [vmem:[#allocation2 + $0x1a8] sm:$0xff]
    %v1108 = vld [vmem:[#allocation2 + $0x1b0] sm:$0xff]
    %v1109 = vld [vmem:[#allocation2 + $0x1b8] sm:$0xff]
    %1110 = vset.pattern.permute.xlu0 4
    %1111 = vperm.xlu0 %1110, %v902
    %v1112 = vpop.permute.xlu0 %1111
    %1114 = vset.pattern.permute.xlu0 4
    %1115 = vperm.xlu0 %1114, %v903
    %v1116 = vpop.permute.xlu0 %1115
    %1118 = vset.pattern.permute.xlu0 4
    %1119 = vperm.xlu0 %1118, %v904
    %v1120 = vpop.permute.xlu0 %1119
    %1122 = vset.pattern.permute.xlu0 4
    %1123 = vperm.xlu0 %1122, %v905
    %v1124 = vpop.permute.xlu0 %1123
    %1126 = vset.pattern.permute.xlu0 4
    %1127 = vperm.xlu0 %1126, %v906
    %v1128 = vpop.permute.xlu0 %1127
    %1130 = vset.pattern.permute.xlu0 4
    %1131 = vperm.xlu0 %1130, %v907
    %v1132 = vpop.permute.xlu0 %1131
    %1134 = vset.pattern.permute.xlu0 4
    %1135 = vperm.xlu0 %1134, %v908
    %v1136 = vpop.permute.xlu0 %1135
    %1138 = vset.pattern.permute.xlu0 4
    %1139 = vperm.xlu0 %1138, %v909
    %v1140 = vpop.permute.xlu0 %1139
    %1142 = vset.pattern.permute.xlu0 4
    %1143 = vperm.xlu0 %1142, %v910
    %v1144 = vpop.permute.xlu0 %1143
    %1146 = vset.pattern.permute.xlu0 4
    %1147 = vperm.xlu0 %1146, %v911
    %v1148 = vpop.permute.xlu0 %1147
    %1150 = vset.pattern.permute.xlu0 4
    %1151 = vperm.xlu0 %1150, %v912
    %v1152 = vpop.permute.xlu0 %1151
    %1154 = vset.pattern.permute.xlu0 4
    %1155 = vperm.xlu0 %1154, %v913
    %v1156 = vpop.permute.xlu0 %1155
    %1158 = vset.pattern.permute.xlu0 4
    %1159 = vperm.xlu0 %1158, %v914
    %v1160 = vpop.permute.xlu0 %1159
    %1162 = vset.pattern.permute.xlu0 4
    %1163 = vperm.xlu0 %1162, %v915
    %v1164 = vpop.permute.xlu0 %1163
    %1166 = vset.pattern.permute.xlu0 4
    %1167 = vperm.xlu0 %1166, %v916
    %v1168 = vpop.permute.xlu0 %1167
    %1170 = vset.pattern.permute.xlu0 4
    %1171 = vperm.xlu0 %1170, %v917
    %v1172 = vpop.permute.xlu0 %1171
    %1174 = vmatpush.msra.mxu0 %v1091
    %1175 = vmatpush.msra.mxu0 %v1088
    %1176 = vmatpush.msra.mxu0 %v1085
    %1177 = vmatpush.msra.mxu0 %v1082
    %1178 = vmatpush.msra.mxu0 %v1079
    %1179 = vmatpush.msra.mxu0 %v1076
    %1180 = vmatpush.msra.mxu0 %v1073
    %1181 = vmatpush.msra.mxu0 %v1070
    %1182 = vmatpush.msra.mxu0 %v1067
    %1183 = vmatpush.msra.mxu0 %v1064
    %1184 = vmatpush.msra.mxu0 %v1061
    %1185 = vmatpush.msra.mxu0 %v1058
    %1186 = vmatpush.msra.mxu0 %v1055
    %1187 = vmatpush.msra.mxu0 %v1052
    %1188 = vmatpush.msra.mxu0 %v1049
    %1189 = vmatpush.msra.mxu0 %v1046
    %1190 = vmatmul.f32.gmra.mxu0 %v1094
    %v1191 = vpop.f32.mrf.mxu0
    %v1192 = vadd.f32 %v1112, %v1191
    %1193 = vmatmul.f32.gmra.mxu0 %v1095
    %v1194 = vpop.f32.mrf.mxu0
    %v1195 = vadd.f32 %v1116, %v1194
    %1196 = vmatmul.f32.gmra.mxu0 %v1096
    %v1197 = vpop.f32.mrf.mxu0
    %v1198 = vadd.f32 %v1120, %v1197
    %1199 = vmatmul.f32.gmra.mxu0 %v1097
    %v1200 = vpop.f32.mrf.mxu0
    %v1201 = vadd.f32 %v1124, %v1200
    %1202 = vmatmul.f32.gmra.mxu0 %v1098
    %v1203 = vpop.f32.mrf.mxu0
    %v1204 = vadd.f32 %v1128, %v1203
    %1205 = vmatmul.f32.gmra.mxu0 %v1099
    %v1206 = vpop.f32.mrf.mxu0
    %v1207 = vadd.f32 %v1132, %v1206
    %1208 = vmatmul.f32.gmra.mxu0 %v1100
    %v1209 = vpop.f32.mrf.mxu0
    %v1210 = vadd.f32 %v1136, %v1209
    %1211 = vmatmul.f32.gmra.mxu0 %v1101
    %v1212 = vpop.f32.mrf.mxu0
    %v1213 = vadd.f32 %v1140, %v1212
    %1214 = vmatmul.f32.gmra.mxu0 %v1102
    %v1215 = vpop.f32.mrf.mxu0
    %v1216 = vadd.f32 %v1144, %v1215
    %1217 = vmatmul.f32.gmra.mxu0 %v1103
    %v1218 = vpop.f32.mrf.mxu0
    %v1219 = vadd.f32 %v1148, %v1218
    %1220 = vmatmul.f32.gmra.mxu0 %v1104
    %v1221 = vpop.f32.mrf.mxu0
    %v1222 = vadd.f32 %v1152, %v1221
    %1223 = vmatmul.f32.gmra.mxu0 %v1105
    %v1224 = vpop.f32.mrf.mxu0
    %v1225 = vadd.f32 %v1156, %v1224
    %1226 = vmatmul.f32.gmra.mxu0 %v1106
    %v1227 = vpop.f32.mrf.mxu0
    %v1228 = vadd.f32 %v1160, %v1227
    %1229 = vmatmul.f32.gmra.mxu0 %v1107
    %v1230 = vpop.f32.mrf.mxu0
    %v1231 = vadd.f32 %v1164, %v1230
    %1232 = vmatmul.f32.gmra.mxu0 %v1108
    %v1233 = vpop.f32.mrf.mxu0
    %v1234 = vadd.f32 %v1168, %v1233
    %1235 = vmatmul.f32.gmra.mxu0 %v1109
    %v1236 = vpop.f32.mrf.mxu0
    %v1237 = vadd.f32 %v1172, %v1236
    %1238 = vdwg.mxu0
    %1239 = vmatpush.msra.mxu0 %v1092
    %1240 = vmatpush.msra.mxu0 %v1089
    %1241 = vmatpush.msra.mxu0 %v1086
    %1242 = vmatpush.msra.mxu0 %v1083
    %1243 = vmatpush.msra.mxu0 %v1080
    %1244 = vmatpush.msra.mxu0 %v1077
    %1245 = vmatpush.msra.mxu0 %v1074
    %1246 = vmatpush.msra.mxu0 %v1071
    %1247 = vmatpush.msra.mxu0 %v1068
    %1248 = vmatpush.msra.mxu0 %v1065
    %1249 = vmatpush.msra.mxu0 %v1062
    %1250 = vmatpush.msra.mxu0 %v1059
    %1251 = vmatpush.msra.mxu0 %v1056
    %1252 = vmatpush.msra.mxu0 %v1053
    %1253 = vmatpush.msra.mxu0 %v1050
    %1254 = vmatpush.msra.mxu0 %v1047
    %1255 = vmatmul.f32.gmra.mxu0 %v1094
    %v1256 = vpop.f32.mrf.mxu0
    %v1257 = vadd.f32 %v1112, %v1256
    %1258 = vmatmul.f32.gmra.mxu0 %v1095
    %v1259 = vpop.f32.mrf.mxu0
    %v1260 = vadd.f32 %v1116, %v1259
    %1261 = vmatmul.f32.gmra.mxu0 %v1096
    %v1262 = vpop.f32.mrf.mxu0
    %v1263 = vadd.f32 %v1120, %v1262
    %1264 = vmatmul.f32.gmra.mxu0 %v1097
    %v1265 = vpop.f32.mrf.mxu0
    %v1266 = vadd.f32 %v1124, %v1265
    %1267 = vmatmul.f32.gmra.mxu0 %v1098
    %v1268 = vpop.f32.mrf.mxu0
    %v1269 = vadd.f32 %v1128, %v1268
    %1270 = vmatmul.f32.gmra.mxu0 %v1099
    %v1271 = vpop.f32.mrf.mxu0
    %v1272 = vadd.f32 %v1132, %v1271
    %1273 = vmatmul.f32.gmra.mxu0 %v1100
    %v1274 = vpop.f32.mrf.mxu0
    %v1275 = vadd.f32 %v1136, %v1274
    %1276 = vmatmul.f32.gmra.mxu0 %v1101
    %v1277 = vpop.f32.mrf.mxu0
    %v1278 = vadd.f32 %v1140, %v1277
    %1279 = vmatmul.f32.gmra.mxu0 %v1102
    %v1280 = vpop.f32.mrf.mxu0
    %v1281 = vadd.f32 %v1144, %v1280
    %1282 = vmatmul.f32.gmra.mxu0 %v1103
    %v1283 = vpop.f32.mrf.mxu0
    %v1284 = vadd.f32 %v1148, %v1283
    %1285 = vmatmul.f32.gmra.mxu0 %v1104
    %v1286 = vpop.f32.mrf.mxu0
    %v1287 = vadd.f32 %v1152, %v1286
    %1288 = vmatmul.f32.gmra.mxu0 %v1105
    %v1289 = vpop.f32.mrf.mxu0
    %v1290 = vadd.f32 %v1156, %v1289
    %1291 = vmatmul.f32.gmra.mxu0 %v1106
    %v1292 = vpop.f32.mrf.mxu0
    %v1293 = vadd.f32 %v1160, %v1292
    %1294 = vmatmul.f32.gmra.mxu0 %v1107
    %v1295 = vpop.f32.mrf.mxu0
    %v1296 = vadd.f32 %v1164, %v1295
    %1297 = vmatmul.f32.gmra.mxu0 %v1108
    %v1298 = vpop.f32.mrf.mxu0
    %v1299 = vadd.f32 %v1168, %v1298
    %1300 = vmatmul.f32.gmra.mxu0 %v1109
    %v1301 = vpop.f32.mrf.mxu0
    %v1302 = vadd.f32 %v1172, %v1301
    %1303 = vdwg.mxu0
    %1304 = vmatpush.msra.mxu0 %v1093
    %1305 = vmatpush.msra.mxu0 %v1090
    %1306 = vmatpush.msra.mxu0 %v1087
    %1307 = vmatpush.msra.mxu0 %v1084
    %1308 = vmatpush.msra.mxu0 %v1081
    %1309 = vmatpush.msra.mxu0 %v1078
    %1310 = vmatpush.msra.mxu0 %v1075
    %1311 = vmatpush.msra.mxu0 %v1072
    %1312 = vmatpush.msra.mxu0 %v1069
    %1313 = vmatpush.msra.mxu0 %v1066
    %1314 = vmatpush.msra.mxu0 %v1063
    %1315 = vmatpush.msra.mxu0 %v1060
    %1316 = vmatpush.msra.mxu0 %v1057
    %1317 = vmatpush.msra.mxu0 %v1054
    %1318 = vmatpush.msra.mxu0 %v1051
    %1319 = vmatpush.msra.mxu0 %v1048
    %1320 = vmatmul.f32.gmra.mxu0 %v1094
    %v1321 = vpop.f32.mrf.mxu0
    %v1322 = vadd.f32 %v1112, %v1321
    %1323 = vmatmul.f32.gmra.mxu0 %v1095
    %v1324 = vpop.f32.mrf.mxu0
    %v1325 = vadd.f32 %v1116, %v1324
    %1326 = vmatmul.f32.gmra.mxu0 %v1096
    %v1327 = vpop.f32.mrf.mxu0
    %v1328 = vadd.f32 %v1120, %v1327
    %1329 = vmatmul.f32.gmra.mxu0 %v1097
    %v1330 = vpop.f32.mrf.mxu0
    %v1331 = vadd.f32 %v1124, %v1330
    %1332 = vmatmul.f32.gmra.mxu0 %v1098
    %v1333 = vpop.f32.mrf.mxu0
    %v1334 = vadd.f32 %v1128, %v1333
    %1335 = vmatmul.f32.gmra.mxu0 %v1099
    %v1336 = vpop.f32.mrf.mxu0
    %v1337 = vadd.f32 %v1132, %v1336
    %1338 = vmatmul.f32.gmra.mxu0 %v1100
    %v1339 = vpop.f32.mrf.mxu0
    %v1340 = vadd.f32 %v1136, %v1339
    %1341 = vmatmul.f32.gmra.mxu0 %v1101
    %v1342 = vpop.f32.mrf.mxu0
    %v1343 = vadd.f32 %v1140, %v1342
    %1344 = vmatmul.f32.gmra.mxu0 %v1102
    %v1345 = vpop.f32.mrf.mxu0
    %v1346 = vadd.f32 %v1144, %v1345
    %1347 = vmatmul.f32.gmra.mxu0 %v1103
    %v1348 = vpop.f32.mrf.mxu0
    %v1349 = vadd.f32 %v1148, %v1348
    %1350 = vmatmul.f32.gmra.mxu0 %v1104
    %v1351 = vpop.f32.mrf.mxu0
    %v1352 = vadd.f32 %v1152, %v1351
    %1353 = vmatmul.f32.gmra.mxu0 %v1105
    %v1354 = vpop.f32.mrf.mxu0
    %v1355 = vadd.f32 %v1156, %v1354
    %1356 = vmatmul.f32.gmra.mxu0 %v1106
    %v1357 = vpop.f32.mrf.mxu0
    %v1358 = vadd.f32 %v1160, %v1357
    %1359 = vmatmul.f32.gmra.mxu0 %v1107
    %v1360 = vpop.f32.mrf.mxu0
    %v1361 = vadd.f32 %v1164, %v1360
    %1362 = vmatmul.f32.gmra.mxu0 %v1108
    %v1363 = vpop.f32.mrf.mxu0
    %v1364 = vadd.f32 %v1168, %v1363
    %1365 = vmatmul.f32.gmra.mxu0 %v1109
    %v1366 = vpop.f32.mrf.mxu0
    %v1367 = vadd.f32 %v1172, %v1366
    %1368 = vdwg.mxu0
    %1369 = vset.pattern.permute.xlu0 5
    %1370 = vperm.xlu0 %1369, %v902
    %v1371 = vpop.permute.xlu0 %1370
    %1373 = vset.pattern.permute.xlu0 5
    %1374 = vperm.xlu0 %1373, %v903
    %v1375 = vpop.permute.xlu0 %1374
    %1377 = vset.pattern.permute.xlu0 5
    %1378 = vperm.xlu0 %1377, %v904
    %v1379 = vpop.permute.xlu0 %1378
    %1381 = vset.pattern.permute.xlu0 5
    %1382 = vperm.xlu0 %1381, %v905
    %v1383 = vpop.permute.xlu0 %1382
    %1385 = vset.pattern.permute.xlu0 5
    %1386 = vperm.xlu0 %1385, %v906
    %v1387 = vpop.permute.xlu0 %1386
    %1389 = vset.pattern.permute.xlu0 5
    %1390 = vperm.xlu0 %1389, %v907
    %v1391 = vpop.permute.xlu0 %1390
    %1393 = vset.pattern.permute.xlu0 5
    %1394 = vperm.xlu0 %1393, %v908
    %v1395 = vpop.permute.xlu0 %1394
    %1397 = vset.pattern.permute.xlu0 5
    %1398 = vperm.xlu0 %1397, %v909
    %v1399 = vpop.permute.xlu0 %1398
    %1401 = vset.pattern.permute.xlu0 5
    %1402 = vperm.xlu0 %1401, %v910
    %v1403 = vpop.permute.xlu0 %1402
    %1405 = vset.pattern.permute.xlu0 5
    %1406 = vperm.xlu0 %1405, %v911
    %v1407 = vpop.permute.xlu0 %1406
    %1409 = vset.pattern.permute.xlu0 5
    %1410 = vperm.xlu0 %1409, %v912
    %v1411 = vpop.permute.xlu0 %1410
    %1413 = vset.pattern.permute.xlu0 5
    %1414 = vperm.xlu0 %1413, %v913
    %v1415 = vpop.permute.xlu0 %1414
    %1417 = vset.pattern.permute.xlu0 5
    %1418 = vperm.xlu0 %1417, %v914
    %v1419 = vpop.permute.xlu0 %1418
    %1421 = vset.pattern.permute.xlu0 5
    %1422 = vperm.xlu0 %1421, %v915
    %v1423 = vpop.permute.xlu0 %1422
    %1425 = vset.pattern.permute.xlu0 5
    %1426 = vperm.xlu0 %1425, %v916
    %v1427 = vpop.permute.xlu0 %1426
    %1429 = vset.pattern.permute.xlu0 5
    %1430 = vperm.xlu0 %1429, %v917
    %v1431 = vpop.permute.xlu0 %1430
    %v1433 = vadd.f32 %v629, %v1371
    %v1434 = vadd.f32 %v742, %v1371
    %v1435 = vadd.f32 %v855, %v1371
    %v1436 = vadd.f32 %v632, %v1375
    %v1437 = vadd.f32 %v745, %v1375
    %v1438 = vadd.f32 %v858, %v1375
    %v1439 = vadd.f32 %v635, %v1379
    %v1440 = vadd.f32 %v748, %v1379
    %v1441 = vadd.f32 %v861, %v1379
    %v1442 = vadd.f32 %v638, %v1383
    %v1443 = vadd.f32 %v751, %v1383
    %v1444 = vadd.f32 %v864, %v1383
    %v1445 = vadd.f32 %v641, %v1387
    %v1446 = vadd.f32 %v754, %v1387
    %v1447 = vadd.f32 %v867, %v1387
    %v1448 = vadd.f32 %v644, %v1391
    %v1449 = vadd.f32 %v757, %v1391
    %v1450 = vadd.f32 %v870, %v1391
    %v1451 = vadd.f32 %v647, %v1395
    %v1452 = vadd.f32 %v760, %v1395
    %v1453 = vadd.f32 %v873, %v1395
    %v1454 = vadd.f32 %v650, %v1399
    %v1455 = vadd.f32 %v763, %v1399
    %v1456 = vadd.f32 %v876, %v1399
    %v1457 = vadd.f32 %v653, %v1403
    %v1458 = vadd.f32 %v766, %v1403
    %v1459 = vadd.f32 %v879, %v1403
    %v1460 = vadd.f32 %v656, %v1407
    %v1461 = vadd.f32 %v769, %v1407
    %v1462 = vadd.f32 %v882, %v1407
    %v1463 = vadd.f32 %v659, %v1411
    %v1464 = vadd.f32 %v772, %v1411
    %v1465 = vadd.f32 %v885, %v1411
    %v1466 = vadd.f32 %v662, %v1415
    %v1467 = vadd.f32 %v775, %v1415
    %v1468 = vadd.f32 %v888, %v1415
    %v1469 = vadd.f32 %v665, %v1419
    %v1470 = vadd.f32 %v778, %v1419
    %v1471 = vadd.f32 %v891, %v1419
    %v1472 = vadd.f32 %v668, %v1423
    %v1473 = vadd.f32 %v781, %v1423
    %v1474 = vadd.f32 %v894, %v1423
    %v1475 = vadd.f32 %v671, %v1427
    %v1476 = vadd.f32 %v784, %v1427
    %v1477 = vadd.f32 %v897, %v1427
    %v1478 = vadd.f32 %v674, %v1431
    %v1479 = vadd.f32 %v787, %v1431
    %v1480 = vadd.f32 %v900, %v1431
    %v1481 = vadd.f32 %v1433, %v1192
    %v1482 = vadd.f32 %v1434, %v1257
    %v1483 = vadd.f32 %v1435, %v1322
    %v1484 = vadd.f32 %v1436, %v1195
    %v1485 = vadd.f32 %v1437, %v1260
    %v1486 = vadd.f32 %v1438, %v1325
    %v1487 = vadd.f32 %v1439, %v1198
    %v1488 = vadd.f32 %v1440, %v1263
    %v1489 = vadd.f32 %v1441, %v1328
    %v1490 = vadd.f32 %v1442, %v1201
    %v1491 = vadd.f32 %v1443, %v1266
    %v1492 = vadd.f32 %v1444, %v1331
    %v1493 = vadd.f32 %v1445, %v1204
    %v1494 = vadd.f32 %v1446, %v1269
    %v1495 = vadd.f32 %v1447, %v1334
    %v1496 = vadd.f32 %v1448, %v1207
    %v1497 = vadd.f32 %v1449, %v1272
    %v1498 = vadd.f32 %v1450, %v1337
    %v1499 = vadd.f32 %v1451, %v1210
    %v1500 = vadd.f32 %v1452, %v1275
    %v1501 = vadd.f32 %v1453, %v1340
    %v1502 = vadd.f32 %v1454, %v1213
    %v1503 = vadd.f32 %v1455, %v1278
    %v1504 = vadd.f32 %v1456, %v1343
    %v1505 = vadd.f32 %v1457, %v1216
    %v1506 = vadd.f32 %v1458, %v1281
    %v1507 = vadd.f32 %v1459, %v1346
    %v1508 = vadd.f32 %v1460, %v1219
    %v1509 = vadd.f32 %v1461, %v1284
    %v1510 = vadd.f32 %v1462, %v1349
    %v1511 = vadd.f32 %v1463, %v1222
    %v1512 = vadd.f32 %v1464, %v1287
    %v1513 = vadd.f32 %v1465, %v1352
    %v1514 = vadd.f32 %v1466, %v1225
    %v1515 = vadd.f32 %v1467, %v1290
    %v1516 = vadd.f32 %v1468, %v1355
    %v1517 = vadd.f32 %v1469, %v1228
    %v1518 = vadd.f32 %v1470, %v1293
    %v1519 = vadd.f32 %v1471, %v1358
    %v1520 = vadd.f32 %v1472, %v1231
    %v1521 = vadd.f32 %v1473, %v1296
    %v1522 = vadd.f32 %v1474, %v1361
    %v1523 = vadd.f32 %v1475, %v1234
    %v1524 = vadd.f32 %v1476, %v1299
    %v1525 = vadd.f32 %v1477, %v1364
    %v1526 = vadd.f32 %v1478, %v1237
    %v1527 = vadd.f32 %v1479, %v1302
    %v1528 = vadd.f32 %v1480, %v1367
    %v1529 = vld [vmem:[#allocation2 + $0x1c0] sm:$0xff]
    %v1530 = vld [vmem:[#allocation2 + $0x1c8] sm:$0xff]
    %v1531 = vld [vmem:[#allocation2 + $0x1d0] sm:$0xff]
    %v1532 = vld [vmem:[#allocation2 + $0x1d8] sm:$0xff]
    %v1533 = vld [vmem:[#allocation2 + $0x1e0] sm:$0xff]
    %v1534 = vld [vmem:[#allocation2 + $0x1e8] sm:$0xff]
    %v1535 = vld [vmem:[#allocation2 + $0x1f0] sm:$0xff]
    %v1536 = vld [vmem:[#allocation2 + $0x1f8] sm:$0xff]
    %v1537 = vld [vmem:[#allocation2 + $0x200] sm:$0xff]
    %v1538 = vld [vmem:[#allocation2 + $0x208] sm:$0xff]
    %v1539 = vld [vmem:[#allocation2 + $0x210] sm:$0xff]
    %v1540 = vld [vmem:[#allocation2 + $0x218] sm:$0xff]
    %v1541 = vld [vmem:[#allocation2 + $0x220] sm:$0xff]
    %v1542 = vld [vmem:[#allocation2 + $0x228] sm:$0xff]
    %v1543 = vld [vmem:[#allocation2 + $0x230] sm:$0xff]
    %v1544 = vld [vmem:[#allocation2 + $0x238] sm:$0xff]
    %v1546 = vsel %vm126, %v1529, 0
    %v1549 = vsel %vm126, %v1530, 0
    %v1552 = vsel %vm126, %v1531, 0
    %v1555 = vsel %vm126, %v1532, 0
    %v1558 = vsel %vm126, %v1533, 0
    %v1561 = vsel %vm126, %v1534, 0
    %v1564 = vsel %vm126, %v1535, 0
    %v1567 = vsel %vm126, %v1536, 0
    %v1570 = vsel %vm126, %v1537, 0
    %v1573 = vsel %vm126, %v1538, 0
    %v1576 = vsel %vm126, %v1539, 0
    %v1579 = vsel %vm126, %v1540, 0
    %v1582 = vsel %vm126, %v1541, 0
    %v1585 = vsel %vm126, %v1542, 0
    %v1588 = vsel %vm126, %v1543, 0
    %v1591 = vsel %vm126, %v1544, 0
    %1593 = vmatpush.msra.mxu0 0.0
    %1594 = vmatpush.msra.mxu0 0.0
    %1595 = vmatpush.msra.mxu0 0.0
    %1596 = vmatpush.msra.mxu0 0.0
    %1597 = vmatpush.msra.mxu0 0.0
    %1598 = vmatpush.msra.mxu0 0.0
    %1599 = vmatpush.msra.mxu0 0.0
    %1600 = vmatpush.msra.mxu0 0.0
    %1601 = vmatpush.msra.mxu0 %v431
    %1602 = vmatpush.msra.mxu0 %v428
    %1603 = vmatpush.msra.mxu0 %v425
    %1604 = vmatpush.msra.mxu0 %v422
    %1605 = vmatpush.msra.mxu0 %v419
    %1606 = vmatpush.msra.mxu0 %v416
    %1607 = vmatpush.msra.mxu0 %v413
    %1608 = vmatpush.msra.mxu0 %v410
    %1609 = vmatmul.f32.gmra.mxu0 %v1546
    %v1610 = vpop.f32.mrf.mxu0
    %v1611 = vadd.f32 0.0, %v1610
    %1612 = vmatmul.f32.gmra.mxu0 %v1549
    %v1613 = vpop.f32.mrf.mxu0
    %v1614 = vadd.f32 0.0, %v1613
    %1615 = vmatmul.f32.gmra.mxu0 %v1552
    %v1616 = vpop.f32.mrf.mxu0
    %v1617 = vadd.f32 0.0, %v1616
    %1618 = vmatmul.f32.gmra.mxu0 %v1555
    %v1619 = vpop.f32.mrf.mxu0
    %v1620 = vadd.f32 0.0, %v1619
    %1621 = vmatmul.f32.gmra.mxu0 %v1558
    %v1622 = vpop.f32.mrf.mxu0
    %v1623 = vadd.f32 0.0, %v1622
    %1624 = vmatmul.f32.gmra.mxu0 %v1561
    %v1625 = vpop.f32.mrf.mxu0
    %v1626 = vadd.f32 0.0, %v1625
    %1627 = vmatmul.f32.gmra.mxu0 %v1564
    %v1628 = vpop.f32.mrf.mxu0
    %v1629 = vadd.f32 0.0, %v1628
    %1630 = vmatmul.f32.gmra.mxu0 %v1567
    %v1631 = vpop.f32.mrf.mxu0
    %v1632 = vadd.f32 0.0, %v1631
    %1633 = vmatmul.f32.gmra.mxu0 %v1570
    %v1634 = vpop.f32.mrf.mxu0
    %v1635 = vadd.f32 0.0, %v1634
    %1636 = vmatmul.f32.gmra.mxu0 %v1573
    %v1637 = vpop.f32.mrf.mxu0
    %v1638 = vadd.f32 0.0, %v1637
    %1639 = vmatmul.f32.gmra.mxu0 %v1576
    %v1640 = vpop.f32.mrf.mxu0
    %v1641 = vadd.f32 0.0, %v1640
    %1642 = vmatmul.f32.gmra.mxu0 %v1579
    %v1643 = vpop.f32.mrf.mxu0
    %v1644 = vadd.f32 0.0, %v1643
    %1645 = vmatmul.f32.gmra.mxu0 %v1582
    %v1646 = vpop.f32.mrf.mxu0
    %v1647 = vadd.f32 0.0, %v1646
    %1648 = vmatmul.f32.gmra.mxu0 %v1585
    %v1649 = vpop.f32.mrf.mxu0
    %v1650 = vadd.f32 0.0, %v1649
    %1651 = vmatmul.f32.gmra.mxu0 %v1588
    %v1652 = vpop.f32.mrf.mxu0
    %v1653 = vadd.f32 0.0, %v1652
    %1654 = vmatmul.f32.gmra.mxu0 %v1591
    %v1655 = vpop.f32.mrf.mxu0
    %v1656 = vadd.f32 0.0, %v1655
    %1657 = vdwg.mxu0
    %1658 = vmatpush.msra.mxu0 0.0
    %1659 = vmatpush.msra.mxu0 0.0
    %1660 = vmatpush.msra.mxu0 0.0
    %1661 = vmatpush.msra.mxu0 0.0
    %1662 = vmatpush.msra.mxu0 0.0
    %1663 = vmatpush.msra.mxu0 0.0
    %1664 = vmatpush.msra.mxu0 0.0
    %1665 = vmatpush.msra.mxu0 0.0
    %1666 = vmatpush.msra.mxu0 %v432
    %1667 = vmatpush.msra.mxu0 %v429
    %1668 = vmatpush.msra.mxu0 %v426
    %1669 = vmatpush.msra.mxu0 %v423
    %1670 = vmatpush.msra.mxu0 %v420
    %1671 = vmatpush.msra.mxu0 %v417
    %1672 = vmatpush.msra.mxu0 %v414
    %1673 = vmatpush.msra.mxu0 %v411
    %1674 = vmatmul.f32.gmra.mxu0 %v1546
    %v1675 = vpop.f32.mrf.mxu0
    %v1676 = vadd.f32 0.0, %v1675
    %1677 = vmatmul.f32.gmra.mxu0 %v1549
    %v1678 = vpop.f32.mrf.mxu0
    %v1679 = vadd.f32 0.0, %v1678
    %1680 = vmatmul.f32.gmra.mxu0 %v1552
    %v1681 = vpop.f32.mrf.mxu0
    %v1682 = vadd.f32 0.0, %v1681
    %1683 = vmatmul.f32.gmra.mxu0 %v1555
    %v1684 = vpop.f32.mrf.mxu0
    %v1685 = vadd.f32 0.0, %v1684
    %1686 = vmatmul.f32.gmra.mxu0 %v1558
    %v1687 = vpop.f32.mrf.mxu0
    %v1688 = vadd.f32 0.0, %v1687
    %1689 = vmatmul.f32.gmra.mxu0 %v1561
    %v1690 = vpop.f32.mrf.mxu0
    %v1691 = vadd.f32 0.0, %v1690
    %1692 = vmatmul.f32.gmra.mxu0 %v1564
    %v1693 = vpop.f32.mrf.mxu0
    %v1694 = vadd.f32 0.0, %v1693
    %1695 = vmatmul.f32.gmra.mxu0 %v1567
    %v1696 = vpop.f32.mrf.mxu0
    %v1697 = vadd.f32 0.0, %v1696
    %1698 = vmatmul.f32.gmra.mxu0 %v1570
    %v1699 = vpop.f32.mrf.mxu0
    %v1700 = vadd.f32 0.0, %v1699
    %1701 = vmatmul.f32.gmra.mxu0 %v1573
    %v1702 = vpop.f32.mrf.mxu0
    %v1703 = vadd.f32 0.0, %v1702
    %1704 = vmatmul.f32.gmra.mxu0 %v1576
    %v1705 = vpop.f32.mrf.mxu0
    %v1706 = vadd.f32 0.0, %v1705
    %1707 = vmatmul.f32.gmra.mxu0 %v1579
    %v1708 = vpop.f32.mrf.mxu0
    %v1709 = vadd.f32 0.0, %v1708
    %1710 = vmatmul.f32.gmra.mxu0 %v1582
    %v1711 = vpop.f32.mrf.mxu0
    %v1712 = vadd.f32 0.0, %v1711
    %1713 = vmatmul.f32.gmra.mxu0 %v1585
    %v1714 = vpop.f32.mrf.mxu0
    %v1715 = vadd.f32 0.0, %v1714
    %1716 = vmatmul.f32.gmra.mxu0 %v1588
    %v1717 = vpop.f32.mrf.mxu0
    %v1718 = vadd.f32 0.0, %v1717
    %1719 = vmatmul.f32.gmra.mxu0 %v1591
    %v1720 = vpop.f32.mrf.mxu0
    %v1721 = vadd.f32 0.0, %v1720
    %1722 = vdwg.mxu0
    %1723 = vmatpush.msra.mxu0 0.0
    %1724 = vmatpush.msra.mxu0 0.0
    %1725 = vmatpush.msra.mxu0 0.0
    %1726 = vmatpush.msra.mxu0 0.0
    %1727 = vmatpush.msra.mxu0 0.0
    %1728 = vmatpush.msra.mxu0 0.0
    %1729 = vmatpush.msra.mxu0 0.0
    %1730 = vmatpush.msra.mxu0 0.0
    %1731 = vmatpush.msra.mxu0 %v433
    %1732 = vmatpush.msra.mxu0 %v430
    %1733 = vmatpush.msra.mxu0 %v427
    %1734 = vmatpush.msra.mxu0 %v424
    %1735 = vmatpush.msra.mxu0 %v421
    %1736 = vmatpush.msra.mxu0 %v418
    %1737 = vmatpush.msra.mxu0 %v415
    %1738 = vmatpush.msra.mxu0 %v412
    %1739 = vmatmul.f32.gmra.mxu0 %v1546
    %v1740 = vpop.f32.mrf.mxu0
    %v1741 = vadd.f32 0.0, %v1740
    %1742 = vmatmul.f32.gmra.mxu0 %v1549
    %v1743 = vpop.f32.mrf.mxu0
    %v1744 = vadd.f32 0.0, %v1743
    %1745 = vmatmul.f32.gmra.mxu0 %v1552
    %v1746 = vpop.f32.mrf.mxu0
    %v1747 = vadd.f32 0.0, %v1746
    %1748 = vmatmul.f32.gmra.mxu0 %v1555
    %v1749 = vpop.f32.mrf.mxu0
    %v1750 = vadd.f32 0.0, %v1749
    %1751 = vmatmul.f32.gmra.mxu0 %v1558
    %v1752 = vpop.f32.mrf.mxu0
    %v1753 = vadd.f32 0.0, %v1752
    %1754 = vmatmul.f32.gmra.mxu0 %v1561
    %v1755 = vpop.f32.mrf.mxu0
    %v1756 = vadd.f32 0.0, %v1755
    %1757 = vmatmul.f32.gmra.mxu0 %v1564
    %v1758 = vpop.f32.mrf.mxu0
    %v1759 = vadd.f32 0.0, %v1758
    %1760 = vmatmul.f32.gmra.mxu0 %v1567
    %v1761 = vpop.f32.mrf.mxu0
    %v1762 = vadd.f32 0.0, %v1761
    %1763 = vmatmul.f32.gmra.mxu0 %v1570
    %v1764 = vpop.f32.mrf.mxu0
    %v1765 = vadd.f32 0.0, %v1764
    %1766 = vmatmul.f32.gmra.mxu0 %v1573
    %v1767 = vpop.f32.mrf.mxu0
    %v1768 = vadd.f32 0.0, %v1767
    %1769 = vmatmul.f32.gmra.mxu0 %v1576
    %v1770 = vpop.f32.mrf.mxu0
    %v1771 = vadd.f32 0.0, %v1770
    %1772 = vmatmul.f32.gmra.mxu0 %v1579
    %v1773 = vpop.f32.mrf.mxu0
    %v1774 = vadd.f32 0.0, %v1773
    %1775 = vmatmul.f32.gmra.mxu0 %v1582
    %v1776 = vpop.f32.mrf.mxu0
    %v1777 = vadd.f32 0.0, %v1776
    %1778 = vmatmul.f32.gmra.mxu0 %v1585
    %v1779 = vpop.f32.mrf.mxu0
    %v1780 = vadd.f32 0.0, %v1779
    %1781 = vmatmul.f32.gmra.mxu0 %v1588
    %v1782 = vpop.f32.mrf.mxu0
    %v1783 = vadd.f32 0.0, %v1782
    %1784 = vmatmul.f32.gmra.mxu0 %v1591
    %v1785 = vpop.f32.mrf.mxu0
    %v1786 = vadd.f32 0.0, %v1785
    %1787 = vdwg.mxu0
    %v1788 = vld [vmem:[#allocation2 + $0x240] sm:$0xff]
    %v1789 = vld [vmem:[#allocation2 + $0x248] sm:$0xff]
    %v1790 = vld [vmem:[#allocation2 + $0x250] sm:$0xff]
    %v1791 = vld [vmem:[#allocation2 + $0x258] sm:$0xff]
    %v1792 = vld [vmem:[#allocation2 + $0x260] sm:$0xff]
    %v1793 = vld [vmem:[#allocation2 + $0x268] sm:$0xff]
    %v1794 = vld [vmem:[#allocation2 + $0x270] sm:$0xff]
    %v1795 = vld [vmem:[#allocation2 + $0x278] sm:$0xff]
    %v1796 = vld [vmem:[#allocation2 + $0x280] sm:$0xff]
    %v1797 = vld [vmem:[#allocation2 + $0x288] sm:$0xff]
    %v1798 = vld [vmem:[#allocation2 + $0x290] sm:$0xff]
    %v1799 = vld [vmem:[#allocation2 + $0x298] sm:$0xff]
    %v1800 = vld [vmem:[#allocation2 + $0x2a0] sm:$0xff]
    %v1801 = vld [vmem:[#allocation2 + $0x2a8] sm:$0xff]
    %v1802 = vld [vmem:[#allocation2 + $0x2b0] sm:$0xff]
    %v1803 = vld [vmem:[#allocation2 + $0x2b8] sm:$0xff]
    %1804 = vmatpush.msra.mxu0 %v1526
    %1805 = vmatpush.msra.mxu0 %v1523
    %1806 = vmatpush.msra.mxu0 %v1520
    %1807 = vmatpush.msra.mxu0 %v1517
    %1808 = vmatpush.msra.mxu0 %v1514
    %1809 = vmatpush.msra.mxu0 %v1511
    %1810 = vmatpush.msra.mxu0 %v1508
    %1811 = vmatpush.msra.mxu0 %v1505
    %1812 = vmatpush.msra.mxu0 %v1502
    %1813 = vmatpush.msra.mxu0 %v1499
    %1814 = vmatpush.msra.mxu0 %v1496
    %1815 = vmatpush.msra.mxu0 %v1493
    %1816 = vmatpush.msra.mxu0 %v1490
    %1817 = vmatpush.msra.mxu0 %v1487
    %1818 = vmatpush.msra.mxu0 %v1484
    %1819 = vmatpush.msra.mxu0 %v1481
    %1820 = vmatmul.f32.gmra.mxu0 %v1788
    %v1821 = vpop.f32.mrf.mxu0
    %v1822 = vadd.f32 0.0, %v1821
    %1823 = vmatmul.f32.gmra.mxu0 %v1789
    %v1824 = vpop.f32.mrf.mxu0
    %v1825 = vadd.f32 0.0, %v1824
    %1826 = vmatmul.f32.gmra.mxu0 %v1790
    %v1827 = vpop.f32.mrf.mxu0
    %v1828 = vadd.f32 0.0, %v1827
    %1829 = vmatmul.f32.gmra.mxu0 %v1791
    %v1830 = vpop.f32.mrf.mxu0
    %v1831 = vadd.f32 0.0, %v1830
    %1832 = vmatmul.f32.gmra.mxu0 %v1792
    %v1833 = vpop.f32.mrf.mxu0
    %v1834 = vadd.f32 0.0, %v1833
    %1835 = vmatmul.f32.gmra.mxu0 %v1793
    %v1836 = vpop.f32.mrf.mxu0
    %v1837 = vadd.f32 0.0, %v1836
    %1838 = vmatmul.f32.gmra.mxu0 %v1794
    %v1839 = vpop.f32.mrf.mxu0
    %v1840 = vadd.f32 0.0, %v1839
    %1841 = vmatmul.f32.gmra.mxu0 %v1795
    %v1842 = vpop.f32.mrf.mxu0
    %v1843 = vadd.f32 0.0, %v1842
    %1844 = vmatmul.f32.gmra.mxu0 %v1796
    %v1845 = vpop.f32.mrf.mxu0
    %v1846 = vadd.f32 0.0, %v1845
    %1847 = vmatmul.f32.gmra.mxu0 %v1797
    %v1848 = vpop.f32.mrf.mxu0
    %v1849 = vadd.f32 0.0, %v1848
    %1850 = vmatmul.f32.gmra.mxu0 %v1798
    %v1851 = vpop.f32.mrf.mxu0
    %v1852 = vadd.f32 0.0, %v1851
    %1853 = vmatmul.f32.gmra.mxu0 %v1799
    %v1854 = vpop.f32.mrf.mxu0
    %v1855 = vadd.f32 0.0, %v1854
    %1856 = vmatmul.f32.gmra.mxu0 %v1800
    %v1857 = vpop.f32.mrf.mxu0
    %v1858 = vadd.f32 0.0, %v1857
    %1859 = vmatmul.f32.gmra.mxu0 %v1801
    %v1860 = vpop.f32.mrf.mxu0
    %v1861 = vadd.f32 0.0, %v1860
    %1862 = vmatmul.f32.gmra.mxu0 %v1802
    %v1863 = vpop.f32.mrf.mxu0
    %v1864 = vadd.f32 0.0, %v1863
    %1865 = vmatmul.f32.gmra.mxu0 %v1803
    %v1866 = vpop.f32.mrf.mxu0
    %v1867 = vadd.f32 0.0, %v1866
    %1868 = vdwg.mxu0
    %1869 = vmatpush.msra.mxu0 %v1527
    %1870 = vmatpush.msra.mxu0 %v1524
    %1871 = vmatpush.msra.mxu0 %v1521
    %1872 = vmatpush.msra.mxu0 %v1518
    %1873 = vmatpush.msra.mxu0 %v1515
    %1874 = vmatpush.msra.mxu0 %v1512
    %1875 = vmatpush.msra.mxu0 %v1509
    %1876 = vmatpush.msra.mxu0 %v1506
    %1877 = vmatpush.msra.mxu0 %v1503
    %1878 = vmatpush.msra.mxu0 %v1500
    %1879 = vmatpush.msra.mxu0 %v1497
    %1880 = vmatpush.msra.mxu0 %v1494
    %1881 = vmatpush.msra.mxu0 %v1491
    %1882 = vmatpush.msra.mxu0 %v1488
    %1883 = vmatpush.msra.mxu0 %v1485
    %1884 = vmatpush.msra.mxu0 %v1482
    %1885 = vmatmul.f32.gmra.mxu0 %v1788
    %v1886 = vpop.f32.mrf.mxu0
    %v1887 = vadd.f32 0.0, %v1886
    %1888 = vmatmul.f32.gmra.mxu0 %v1789
    %v1889 = vpop.f32.mrf.mxu0
    %v1890 = vadd.f32 0.0, %v1889
    %1891 = vmatmul.f32.gmra.mxu0 %v1790
    %v1892 = vpop.f32.mrf.mxu0
    %v1893 = vadd.f32 0.0, %v1892
    %1894 = vmatmul.f32.gmra.mxu0 %v1791
    %v1895 = vpop.f32.mrf.mxu0
    %v1896 = vadd.f32 0.0, %v1895
    %1897 = vmatmul.f32.gmra.mxu0 %v1792
    %v1898 = vpop.f32.mrf.mxu0
    %v1899 = vadd.f32 0.0, %v1898
    %1900 = vmatmul.f32.gmra.mxu0 %v1793
    %v1901 = vpop.f32.mrf.mxu0
    %v1902 = vadd.f32 0.0, %v1901
    %1903 = vmatmul.f32.gmra.mxu0 %v1794
    %v1904 = vpop.f32.mrf.mxu0
    %v1905 = vadd.f32 0.0, %v1904
    %1906 = vmatmul.f32.gmra.mxu0 %v1795
    %v1907 = vpop.f32.mrf.mxu0
    %v1908 = vadd.f32 0.0, %v1907
    %1909 = vmatmul.f32.gmra.mxu0 %v1796
    %v1910 = vpop.f32.mrf.mxu0
    %v1911 = vadd.f32 0.0, %v1910
    %1912 = vmatmul.f32.gmra.mxu0 %v1797
    %v1913 = vpop.f32.mrf.mxu0
    %v1914 = vadd.f32 0.0, %v1913
    %1915 = vmatmul.f32.gmra.mxu0 %v1798
    %v1916 = vpop.f32.mrf.mxu0
    %v1917 = vadd.f32 0.0, %v1916
    %1918 = vmatmul.f32.gmra.mxu0 %v1799
    %v1919 = vpop.f32.mrf.mxu0
    %v1920 = vadd.f32 0.0, %v1919
    %1921 = vmatmul.f32.gmra.mxu0 %v1800
    %v1922 = vpop.f32.mrf.mxu0
    %v1923 = vadd.f32 0.0, %v1922
    %1924 = vmatmul.f32.gmra.mxu0 %v1801
    %v1925 = vpop.f32.mrf.mxu0
    %v1926 = vadd.f32 0.0, %v1925
    %1927 = vmatmul.f32.gmra.mxu0 %v1802
    %v1928 = vpop.f32.mrf.mxu0
    %v1929 = vadd.f32 0.0, %v1928
    %1930 = vmatmul.f32.gmra.mxu0 %v1803
    %v1931 = vpop.f32.mrf.mxu0
    %v1932 = vadd.f32 0.0, %v1931
    %1933 = vdwg.mxu0
    %1934 = vmatpush.msra.mxu0 %v1528
    %1935 = vmatpush.msra.mxu0 %v1525
    %1936 = vmatpush.msra.mxu0 %v1522
    %1937 = vmatpush.msra.mxu0 %v1519
    %1938 = vmatpush.msra.mxu0 %v1516
    %1939 = vmatpush.msra.mxu0 %v1513
    %1940 = vmatpush.msra.mxu0 %v1510
    %1941 = vmatpush.msra.mxu0 %v1507
    %1942 = vmatpush.msra.mxu0 %v1504
    %1943 = vmatpush.msra.mxu0 %v1501
    %1944 = vmatpush.msra.mxu0 %v1498
    %1945 = vmatpush.msra.mxu0 %v1495
    %1946 = vmatpush.msra.mxu0 %v1492
    %1947 = vmatpush.msra.mxu0 %v1489
    %1948 = vmatpush.msra.mxu0 %v1486
    %1949 = vmatpush.msra.mxu0 %v1483
    %1950 = vmatmul.f32.gmra.mxu0 %v1788
    %v1951 = vpop.f32.mrf.mxu0
    %v1952 = vadd.f32 0.0, %v1951
    %1953 = vmatmul.f32.gmra.mxu0 %v1789
    %v1954 = vpop.f32.mrf.mxu0
    %v1955 = vadd.f32 0.0, %v1954
    %1956 = vmatmul.f32.gmra.mxu0 %v1790
    %v1957 = vpop.f32.mrf.mxu0
    %v1958 = vadd.f32 0.0, %v1957
    %1959 = vmatmul.f32.gmra.mxu0 %v1791
    %v1960 = vpop.f32.mrf.mxu0
    %v1961 = vadd.f32 0.0, %v1960
    %1962 = vmatmul.f32.gmra.mxu0 %v1792
    %v1963 = vpop.f32.mrf.mxu0
    %v1964 = vadd.f32 0.0, %v1963
    %1965 = vmatmul.f32.gmra.mxu0 %v1793
    %v1966 = vpop.f32.mrf.mxu0
    %v1967 = vadd.f32 0.0, %v1966
    %1968 = vmatmul.f32.gmra.mxu0 %v1794
    %v1969 = vpop.f32.mrf.mxu0
    %v1970 = vadd.f32 0.0, %v1969
    %1971 = vmatmul.f32.gmra.mxu0 %v1795
    %v1972 = vpop.f32.mrf.mxu0
    %v1973 = vadd.f32 0.0, %v1972
    %1974 = vmatmul.f32.gmra.mxu0 %v1796
    %v1975 = vpop.f32.mrf.mxu0
    %v1976 = vadd.f32 0.0, %v1975
    %1977 = vmatmul.f32.gmra.mxu0 %v1797
    %v1978 = vpop.f32.mrf.mxu0
    %v1979 = vadd.f32 0.0, %v1978
    %1980 = vmatmul.f32.gmra.mxu0 %v1798
    %v1981 = vpop.f32.mrf.mxu0
    %v1982 = vadd.f32 0.0, %v1981
    %1983 = vmatmul.f32.gmra.mxu0 %v1799
    %v1984 = vpop.f32.mrf.mxu0
    %v1985 = vadd.f32 0.0, %v1984
    %1986 = vmatmul.f32.gmra.mxu0 %v1800
    %v1987 = vpop.f32.mrf.mxu0
    %v1988 = vadd.f32 0.0, %v1987
    %1989 = vmatmul.f32.gmra.mxu0 %v1801
    %v1990 = vpop.f32.mrf.mxu0
    %v1991 = vadd.f32 0.0, %v1990
    %1992 = vmatmul.f32.gmra.mxu0 %v1802
    %v1993 = vpop.f32.mrf.mxu0
    %v1994 = vadd.f32 0.0, %v1993
    %1995 = vmatmul.f32.gmra.mxu0 %v1803
    %v1996 = vpop.f32.mrf.mxu0
    %v1997 = vadd.f32 0.0, %v1996
    %1998 = vdwg.mxu0
    %v1999 = vadd.f32 %v1611, %v1822
    %v2000 = vadd.f32 %v1676, %v1887
    %v2001 = vadd.f32 %v1741, %v1952
    %v2002 = vadd.f32 %v1614, %v1825
    %v2003 = vadd.f32 %v1679, %v1890
    %v2004 = vadd.f32 %v1744, %v1955
    %v2005 = vadd.f32 %v1617, %v1828
    %v2006 = vadd.f32 %v1682, %v1893
    %v2007 = vadd.f32 %v1747, %v1958
    %v2008 = vadd.f32 %v1620, %v1831
    %v2009 = vadd.f32 %v1685, %v1896
    %v2010 = vadd.f32 %v1750, %v1961
    %v2011 = vadd.f32 %v1623, %v1834
    %v2012 = vadd.f32 %v1688, %v1899
    %v2013 = vadd.f32 %v1753, %v1964
    %v2014 = vadd.f32 %v1626, %v1837
    %v2015 = vadd.f32 %v1691, %v1902
    %v2016 = vadd.f32 %v1756, %v1967
    %v2017 = vadd.f32 %v1629, %v1840
    %v2018 = vadd.f32 %v1694, %v1905
    %v2019 = vadd.f32 %v1759, %v1970
    %v2020 = vadd.f32 %v1632, %v1843
    %v2021 = vadd.f32 %v1697, %v1908
    %v2022 = vadd.f32 %v1762, %v1973
    %2023 = vset.pattern.permute.xlu0 6
    %2024 = vperm.xlu0 %2023, %v78
    %v2025 = vpop.permute.xlu0 %2024
    %2027 = vset.pattern.permute.xlu0 6
    %2028 = vperm.xlu0 %2027, %v79
    %v2029 = vpop.permute.xlu0 %2028
    %2031 = vset.pattern.permute.xlu0 6
    %2032 = vperm.xlu0 %2031, %v80
    %v2033 = vpop.permute.xlu0 %2032
    %2035 = vset.pattern.permute.xlu0 6
    %2036 = vperm.xlu0 %2035, %v81
    %v2037 = vpop.permute.xlu0 %2036
    %2039 = vset.pattern.permute.xlu0 6
    %2040 = vperm.xlu0 %2039, %v82
    %v2041 = vpop.permute.xlu0 %2040
    %2043 = vset.pattern.permute.xlu0 6
    %2044 = vperm.xlu0 %2043, %v83
    %v2045 = vpop.permute.xlu0 %2044
    %2047 = vset.pattern.permute.xlu0 6
    %2048 = vperm.xlu0 %2047, %v84
    %v2049 = vpop.permute.xlu0 %2048
    %2051 = vset.pattern.permute.xlu0 6
    %2052 = vperm.xlu0 %2051, %v85
    %v2053 = vpop.permute.xlu0 %2052
    %v2055 = vadd.f32 %v1999, %v2025
    %v2056 = vadd.f32 %v2000, %v2025
    %v2057 = vadd.f32 %v2001, %v2025
    %v2058 = vadd.f32 %v2002, %v2029
    %v2059 = vadd.f32 %v2003, %v2029
    %v2060 = vadd.f32 %v2004, %v2029
    %v2061 = vadd.f32 %v2005, %v2033
    %v2062 = vadd.f32 %v2006, %v2033
    %v2063 = vadd.f32 %v2007, %v2033
    %v2064 = vadd.f32 %v2008, %v2037
    %v2065 = vadd.f32 %v2009, %v2037
    %v2066 = vadd.f32 %v2010, %v2037
    %v2067 = vadd.f32 %v2011, %v2041
    %v2068 = vadd.f32 %v2012, %v2041
    %v2069 = vadd.f32 %v2013, %v2041
    %v2070 = vadd.f32 %v2014, %v2045
    %v2071 = vadd.f32 %v2015, %v2045
    %v2072 = vadd.f32 %v2016, %v2045
    %v2073 = vadd.f32 %v2017, %v2049
    %v2074 = vadd.f32 %v2018, %v2049
    %v2075 = vadd.f32 %v2019, %v2049
    %v2076 = vadd.f32 %v2020, %v2053
    %v2077 = vadd.f32 %v2021, %v2053
    %v2078 = vadd.f32 %v2022, %v2053
    %v2079 = vmax.f32 %v2055, 0.0
    %v2080 = vmax.f32 %v2056, 0.0
    %v2081 = vmax.f32 %v2057, 0.0
    %v2082 = vmax.f32 %v2058, 0.0
    %v2083 = vmax.f32 %v2059, 0.0
    %v2084 = vmax.f32 %v2060, 0.0
    %v2085 = vmax.f32 %v2061, 0.0
    %v2086 = vmax.f32 %v2062, 0.0
    %v2087 = vmax.f32 %v2063, 0.0
    %v2088 = vmax.f32 %v2064, 0.0
    %v2089 = vmax.f32 %v2065, 0.0
    %v2090 = vmax.f32 %v2066, 0.0
    %v2091 = vmax.f32 %v2067, 0.0
    %v2092 = vmax.f32 %v2068, 0.0
    %v2093 = vmax.f32 %v2069, 0.0
    %v2094 = vmax.f32 %v2070, 0.0
    %v2095 = vmax.f32 %v2071, 0.0
    %v2096 = vmax.f32 %v2072, 0.0
    %v2097 = vmax.f32 %v2073, 0.0
    %v2098 = vmax.f32 %v2074, 0.0
    %v2099 = vmax.f32 %v2075, 0.0
    %v2100 = vmax.f32 %v2076, 0.0
    %v2101 = vmax.f32 %v2077, 0.0
    %v2102 = vmax.f32 %v2078, 0.0
    %v2103 = vld [vmem:[#allocation2 + $0x2c0] sm:$0xff]
    %v2104 = vld [vmem:[#allocation2 + $0x2c8] sm:$0xff]
    %v2105 = vld [vmem:[#allocation2 + $0x2d0] sm:$0xff]
    %v2106 = vld [vmem:[#allocation2 + $0x2d8] sm:$0xff]
    %v2107 = vld [vmem:[#allocation2 + $0x2e0] sm:$0xff]
    %v2108 = vld [vmem:[#allocation2 + $0x2e8] sm:$0xff]
    %v2109 = vld [vmem:[#allocation2 + $0x2f0] sm:$0xff]
    %v2110 = vld [vmem:[#allocation2 + $0x2f8] sm:$0xff]
    %2111 = vset.pattern.permute.xlu0 7
    %2112 = vperm.xlu0 %2111, %v78
    %v2113 = vpop.permute.xlu0 %2112
    %2115 = vset.pattern.permute.xlu0 7
    %2116 = vperm.xlu0 %2115, %v79
    %v2117 = vpop.permute.xlu0 %2116
    %2119 = vset.pattern.permute.xlu0 7
    %2120 = vperm.xlu0 %2119, %v80
    %v2121 = vpop.permute.xlu0 %2120
    %2123 = vset.pattern.permute.xlu0 7
    %2124 = vperm.xlu0 %2123, %v81
    %v2125 = vpop.permute.xlu0 %2124
    %2127 = vset.pattern.permute.xlu0 7
    %2128 = vperm.xlu0 %2127, %v82
    %v2129 = vpop.permute.xlu0 %2128
    %2131 = vset.pattern.permute.xlu0 7
    %2132 = vperm.xlu0 %2131, %v83
    %v2133 = vpop.permute.xlu0 %2132
    %2135 = vset.pattern.permute.xlu0 7
    %2136 = vperm.xlu0 %2135, %v84
    %v2137 = vpop.permute.xlu0 %2136
    %2139 = vset.pattern.permute.xlu0 7
    %2140 = vperm.xlu0 %2139, %v85
    %v2141 = vpop.permute.xlu0 %2140
    %v2144 = vsel %vm126, %v2103, 0
    %v2147 = vsel %vm126, %v2104, 0
    %v2150 = vsel %vm126, %v2105, 0
    %v2153 = vsel %vm126, %v2106, 0
    %v2156 = vsel %vm126, %v2107, 0
    %v2159 = vsel %vm126, %v2108, 0
    %v2162 = vsel %vm126, %v2109, 0
    %v2165 = vsel %vm126, %v2110, 0
    %2167 = vmatpush.msra.mxu0 0.0
    %2168 = vmatpush.msra.mxu0 0.0
    %2169 = vmatpush.msra.mxu0 0.0
    %2170 = vmatpush.msra.mxu0 0.0
    %2171 = vmatpush.msra.mxu0 0.0
    %2172 = vmatpush.msra.mxu0 0.0
    %2173 = vmatpush.msra.mxu0 0.0
    %2174 = vmatpush.msra.mxu0 0.0
    %2175 = vmatpush.msra.mxu0 %v2100
    %2176 = vmatpush.msra.mxu0 %v2097
    %2177 = vmatpush.msra.mxu0 %v2094
    %2178 = vmatpush.msra.mxu0 %v2091
    %2179 = vmatpush.msra.mxu0 %v2088
    %2180 = vmatpush.msra.mxu0 %v2085
    %2181 = vmatpush.msra.mxu0 %v2082
    %2182 = vmatpush.msra.mxu0 %v2079
    %2183 = vmatmul.f32.gmra.mxu0 %v2144
    %v2184 = vpop.f32.mrf.mxu0
    %v2185 = vadd.f32 %v2113, %v2184
    %2186 = vmatmul.f32.gmra.mxu0 %v2147
    %v2187 = vpop.f32.mrf.mxu0
    %v2188 = vadd.f32 %v2117, %v2187
    %2189 = vmatmul.f32.gmra.mxu0 %v2150
    %v2190 = vpop.f32.mrf.mxu0
    %v2191 = vadd.f32 %v2121, %v2190
    %2192 = vmatmul.f32.gmra.mxu0 %v2153
    %v2193 = vpop.f32.mrf.mxu0
    %v2194 = vadd.f32 %v2125, %v2193
    %2195 = vmatmul.f32.gmra.mxu0 %v2156
    %v2196 = vpop.f32.mrf.mxu0
    %v2197 = vadd.f32 %v2129, %v2196
    %2198 = vmatmul.f32.gmra.mxu0 %v2159
    %v2199 = vpop.f32.mrf.mxu0
    %v2200 = vadd.f32 %v2133, %v2199
    %2201 = vmatmul.f32.gmra.mxu0 %v2162
    %v2202 = vpop.f32.mrf.mxu0
    %v2203 = vadd.f32 %v2137, %v2202
    %2204 = vmatmul.f32.gmra.mxu0 %v2165
    %v2205 = vpop.f32.mrf.mxu0
    %v2206 = vadd.f32 %v2141, %v2205
    %2207 = vdwg.mxu0
    %2208 = vmatpush.msra.mxu0 0.0
    %2209 = vmatpush.msra.mxu0 0.0
    %2210 = vmatpush.msra.mxu0 0.0
    %2211 = vmatpush.msra.mxu0 0.0
    %2212 = vmatpush.msra.mxu0 0.0
    %2213 = vmatpush.msra.mxu0 0.0
    %2214 = vmatpush.msra.mxu0 0.0
    %2215 = vmatpush.msra.mxu0 0.0
    %2216 = vmatpush.msra.mxu0 %v2101
    %2217 = vmatpush.msra.mxu0 %v2098
    %2218 = vmatpush.msra.mxu0 %v2095
    %2219 = vmatpush.msra.mxu0 %v2092
    %2220 = vmatpush.msra.mxu0 %v2089
    %2221 = vmatpush.msra.mxu0 %v2086
    %2222 = vmatpush.msra.mxu0 %v2083
    %2223 = vmatpush.msra.mxu0 %v2080
    %2224 = vmatmul.f32.gmra.mxu0 %v2144
    %v2225 = vpop.f32.mrf.mxu0
    %v2226 = vadd.f32 %v2113, %v2225
    %2227 = vmatmul.f32.gmra.mxu0 %v2147
    %v2228 = vpop.f32.mrf.mxu0
    %v2229 = vadd.f32 %v2117, %v2228
    %2230 = vmatmul.f32.gmra.mxu0 %v2150
    %v2231 = vpop.f32.mrf.mxu0
    %v2232 = vadd.f32 %v2121, %v2231
    %2233 = vmatmul.f32.gmra.mxu0 %v2153
    %v2234 = vpop.f32.mrf.mxu0
    %v2235 = vadd.f32 %v2125, %v2234
    %2236 = vmatmul.f32.gmra.mxu0 %v2156
    %v2237 = vpop.f32.mrf.mxu0
    %v2238 = vadd.f32 %v2129, %v2237
    %2239 = vmatmul.f32.gmra.mxu0 %v2159
    %v2240 = vpop.f32.mrf.mxu0
    %v2241 = vadd.f32 %v2133, %v2240
    %2242 = vmatmul.f32.gmra.mxu0 %v2162
    %v2243 = vpop.f32.mrf.mxu0
    %v2244 = vadd.f32 %v2137, %v2243
    %2245 = vmatmul.f32.gmra.mxu0 %v2165
    %v2246 = vpop.f32.mrf.mxu0
    %v2247 = vadd.f32 %v2141, %v2246
    %2248 = vdwg.mxu0
    %2249 = vmatpush.msra.mxu0 0.0
    %2250 = vmatpush.msra.mxu0 0.0
    %2251 = vmatpush.msra.mxu0 0.0
    %2252 = vmatpush.msra.mxu0 0.0
    %2253 = vmatpush.msra.mxu0 0.0
    %2254 = vmatpush.msra.mxu0 0.0
    %2255 = vmatpush.msra.mxu0 0.0
    %2256 = vmatpush.msra.mxu0 0.0
    %2257 = vmatpush.msra.mxu0 %v2102
    %2258 = vmatpush.msra.mxu0 %v2099
    %2259 = vmatpush.msra.mxu0 %v2096
    %2260 = vmatpush.msra.mxu0 %v2093
    %2261 = vmatpush.msra.mxu0 %v2090
    %2262 = vmatpush.msra.mxu0 %v2087
    %2263 = vmatpush.msra.mxu0 %v2084
    %2264 = vmatpush.msra.mxu0 %v2081
    %2265 = vmatmul.f32.gmra.mxu0 %v2144
    %v2266 = vpop.f32.mrf.mxu0
    %v2267 = vadd.f32 %v2113, %v2266
    %2268 = vmatmul.f32.gmra.mxu0 %v2147
    %v2269 = vpop.f32.mrf.mxu0
    %v2270 = vadd.f32 %v2117, %v2269
    %2271 = vmatmul.f32.gmra.mxu0 %v2150
    %v2272 = vpop.f32.mrf.mxu0
    %v2273 = vadd.f32 %v2121, %v2272
    %2274 = vmatmul.f32.gmra.mxu0 %v2153
    %v2275 = vpop.f32.mrf.mxu0
    %v2276 = vadd.f32 %v2125, %v2275
    %2277 = vmatmul.f32.gmra.mxu0 %v2156
    %v2278 = vpop.f32.mrf.mxu0
    %v2279 = vadd.f32 %v2129, %v2278
    %2280 = vmatmul.f32.gmra.mxu0 %v2159
    %v2281 = vpop.f32.mrf.mxu0
    %v2282 = vadd.f32 %v2133, %v2281
    %2283 = vmatmul.f32.gmra.mxu0 %v2162
    %v2284 = vpop.f32.mrf.mxu0
    %v2285 = vadd.f32 %v2137, %v2284
    %2286 = vmatmul.f32.gmra.mxu0 %v2165
    %v2287 = vpop.f32.mrf.mxu0
    %v2288 = vadd.f32 %v2141, %v2287
    %2289 = vdwg.mxu0
    %v2290 = vadd.f32 %v1635, %v1846
    %v2291 = vadd.f32 %v1700, %v1911
    %v2292 = vadd.f32 %v1765, %v1976
    %v2293 = vadd.f32 %v1638, %v1849
    %v2294 = vadd.f32 %v1703, %v1914
    %v2295 = vadd.f32 %v1768, %v1979
    %v2296 = vadd.f32 %v1641, %v1852
    %v2297 = vadd.f32 %v1706, %v1917
    %v2298 = vadd.f32 %v1771, %v1982
    %v2299 = vadd.f32 %v1644, %v1855
    %v2300 = vadd.f32 %v1709, %v1920
    %v2301 = vadd.f32 %v1774, %v1985
    %v2302 = vadd.f32 %v1647, %v1858
    %v2303 = vadd.f32 %v1712, %v1923
    %v2304 = vadd.f32 %v1777, %v1988
    %v2305 = vadd.f32 %v1650, %v1861
    %v2306 = vadd.f32 %v1715, %v1926
    %v2307 = vadd.f32 %v1780, %v1991
    %v2308 = vadd.f32 %v1653, %v1864
    %v2309 = vadd.f32 %v1718, %v1929
    %v2310 = vadd.f32 %v1783, %v1994
    %v2311 = vadd.f32 %v1656, %v1867
    %v2312 = vadd.f32 %v1721, %v1932
    %v2313 = vadd.f32 %v1786, %v1997
    %2314 = vset.pattern.permute.xlu0 8
    %2315 = vperm.xlu0 %2314, %v78
    %v2316 = vpop.permute.xlu0 %2315
    %2318 = vset.pattern.permute.xlu0 8
    %2319 = vperm.xlu0 %2318, %v79
    %v2320 = vpop.permute.xlu0 %2319
    %2322 = vset.pattern.permute.xlu0 8
    %2323 = vperm.xlu0 %2322, %v80
    %v2324 = vpop.permute.xlu0 %2323
    %2326 = vset.pattern.permute.xlu0 8
    %2327 = vperm.xlu0 %2326, %v81
    %v2328 = vpop.permute.xlu0 %2327
    %2330 = vset.pattern.permute.xlu0 8
    %2331 = vperm.xlu0 %2330, %v82
    %v2332 = vpop.permute.xlu0 %2331
    %2334 = vset.pattern.permute.xlu0 8
    %2335 = vperm.xlu0 %2334, %v83
    %v2336 = vpop.permute.xlu0 %2335
    %2338 = vset.pattern.permute.xlu0 8
    %2339 = vperm.xlu0 %2338, %v84
    %v2340 = vpop.permute.xlu0 %2339
    %2342 = vset.pattern.permute.xlu0 8
    %2343 = vperm.xlu0 %2342, %v85
    %v2344 = vpop.permute.xlu0 %2343
    %v2346 = vadd.f32 %v2290, %v2316
    %v2347 = vadd.f32 %v2291, %v2316
    %v2348 = vadd.f32 %v2292, %v2316
    %v2349 = vadd.f32 %v2293, %v2320
    %v2350 = vadd.f32 %v2294, %v2320
    %v2351 = vadd.f32 %v2295, %v2320
    %v2352 = vadd.f32 %v2296, %v2324
    %v2353 = vadd.f32 %v2297, %v2324
    %v2354 = vadd.f32 %v2298, %v2324
    %v2355 = vadd.f32 %v2299, %v2328
    %v2356 = vadd.f32 %v2300, %v2328
    %v2357 = vadd.f32 %v2301, %v2328
    %v2358 = vadd.f32 %v2302, %v2332
    %v2359 = vadd.f32 %v2303, %v2332
    %v2360 = vadd.f32 %v2304, %v2332
    %v2361 = vadd.f32 %v2305, %v2336
    %v2362 = vadd.f32 %v2306, %v2336
    %v2363 = vadd.f32 %v2307, %v2336
    %v2364 = vadd.f32 %v2308, %v2340
    %v2365 = vadd.f32 %v2309, %v2340
    %v2366 = vadd.f32 %v2310, %v2340
    %v2367 = vadd.f32 %v2311, %v2344
    %v2368 = vadd.f32 %v2312, %v2344
    %v2369 = vadd.f32 %v2313, %v2344
    %v2370 = vadd.f32 %v2346, %v2185
    %v2371 = vadd.f32 %v2347, %v2226
    %v2372 = vadd.f32 %v2348, %v2267
    %v2373 = vadd.f32 %v2349, %v2188
    %v2374 = vadd.f32 %v2350, %v2229
    %v2375 = vadd.f32 %v2351, %v2270
    %v2376 = vadd.f32 %v2352, %v2191
    %v2377 = vadd.f32 %v2353, %v2232
    %v2378 = vadd.f32 %v2354, %v2273
    %v2379 = vadd.f32 %v2355, %v2194
    %v2380 = vadd.f32 %v2356, %v2235
    %v2381 = vadd.f32 %v2357, %v2276
    %v2382 = vadd.f32 %v2358, %v2197
    %v2383 = vadd.f32 %v2359, %v2238
    %v2384 = vadd.f32 %v2360, %v2279
    %v2385 = vadd.f32 %v2361, %v2200
    %v2386 = vadd.f32 %v2362, %v2241
    %v2387 = vadd.f32 %v2363, %v2282
    %v2388 = vadd.f32 %v2364, %v2203
    %v2389 = vadd.f32 %v2365, %v2244
    %v2390 = vadd.f32 %v2366, %v2285
    %v2391 = vadd.f32 %v2367, %v2206
    %v2392 = vadd.f32 %v2368, %v2247
    %v2393 = vadd.f32 %v2369, %v2288
    %v2394 = vld [vmem:[#allocation2 + $0x300] sm:$0xff]
    %v2395 = vld [vmem:[#allocation2 + $0x308] sm:$0xff]
    %v2396 = vld [vmem:[#allocation2 + $0x310] sm:$0xff]
    %v2397 = vld [vmem:[#allocation2 + $0x318] sm:$0xff]
    %v2398 = vld [vmem:[#allocation2 + $0x320] sm:$0xff]
    %v2399 = vld [vmem:[#allocation2 + $0x328] sm:$0xff]
    %v2400 = vld [vmem:[#allocation2 + $0x330] sm:$0xff]
    %v2401 = vld [vmem:[#allocation2 + $0x338] sm:$0xff]
    %v2402 = vld [vmem:[#allocation2 + $0x340] sm:$0xff]
    %v2403 = vld [vmem:[#allocation2 + $0x348] sm:$0xff]
    %v2404 = vld [vmem:[#allocation2 + $0x350] sm:$0xff]
    %v2405 = vld [vmem:[#allocation2 + $0x358] sm:$0xff]
    %v2406 = vld [vmem:[#allocation2 + $0x360] sm:$0xff]
    %v2407 = vld [vmem:[#allocation2 + $0x368] sm:$0xff]
    %v2408 = vld [vmem:[#allocation2 + $0x370] sm:$0xff]
    %v2409 = vld [vmem:[#allocation2 + $0x378] sm:$0xff]
    %v2410 = vld [vmem:[#allocation2 + $0x380] sm:$0xff]
    %v2411 = vld [vmem:[#allocation2 + $0x388] sm:$0xff]
    %v2412 = vld [vmem:[#allocation2 + $0x390] sm:$0xff]
    %v2413 = vld [vmem:[#allocation2 + $0x398] sm:$0xff]
    %v2414 = vld [vmem:[#allocation2 + $0x3a0] sm:$0xff]
    %v2415 = vld [vmem:[#allocation2 + $0x3a8] sm:$0xff]
    %v2416 = vld [vmem:[#allocation2 + $0x3b0] sm:$0xff]
    %v2417 = vld [vmem:[#allocation2 + $0x3b8] sm:$0xff]
    %v2418 = vld [vmem:[#allocation2 + $0x3c0] sm:$0xff]
    %v2419 = vld [vmem:[#allocation2 + $0x3c8] sm:$0xff]
    %v2420 = vld [vmem:[#allocation2 + $0x3d0] sm:$0xff]
    %v2421 = vld [vmem:[#allocation2 + $0x3d8] sm:$0xff]
    %v2422 = vld [vmem:[#allocation2 + $0x3e0] sm:$0xff]
    %v2423 = vld [vmem:[#allocation2 + $0x3e8] sm:$0xff]
    %v2424 = vld [vmem:[#allocation2 + $0x3f0] sm:$0xff]
    %v2425 = vld [vmem:[#allocation2 + $0x3f8] sm:$0xff]
    %v2426 = vld [vmem:[%s3] sm:$0xff]
    %v2427 = vld [vmem:[%s3 + $0x8] sm:$0xff]
    %v2428 = vld [vmem:[%s3 + $0x10] sm:$0xff]
    %v2429 = vld [vmem:[%s3 + $0x18] sm:$0xff]
    %v2430 = vld [vmem:[%s3 + $0x20] sm:$0xff]
    %v2431 = vld [vmem:[%s3 + $0x28] sm:$0xff]
    %v2432 = vld [vmem:[%s3 + $0x30] sm:$0xff]
    %v2433 = vld [vmem:[%s3 + $0x38] sm:$0xff]
    %v2434 = vld [vmem:[%s3 + $0x40] sm:$0xff]
    %v2435 = vld [vmem:[%s3 + $0x48] sm:$0xff]
    %v2436 = vld [vmem:[%s3 + $0x50] sm:$0xff]
    %v2437 = vld [vmem:[%s3 + $0x58] sm:$0xff]
    %v2438 = vld [vmem:[%s3 + $0x60] sm:$0xff]
    %v2439 = vld [vmem:[%s3 + $0x68] sm:$0xff]
    %v2440 = vld [vmem:[%s3 + $0x70] sm:$0xff]
    %v2441 = vld [vmem:[%s3 + $0x78] sm:$0xff]
    %v2442 = vld [vmem:[%s3 + $0x80] sm:$0xff]
    %v2443 = vld [vmem:[%s3 + $0x88] sm:$0xff]
    %v2444 = vld [vmem:[%s3 + $0x90] sm:$0xff]
    %v2445 = vld [vmem:[%s3 + $0x98] sm:$0xff]
    %v2446 = vld [vmem:[%s3 + $0xa0] sm:$0xff]
    %v2447 = vld [vmem:[%s3 + $0xa8] sm:$0xff]
    %v2448 = vld [vmem:[%s3 + $0xb0] sm:$0xff]
    %v2449 = vld [vmem:[%s3 + $0xb8] sm:$0xff]
    %v2450 = vld [vmem:[%s3 + $0xc0] sm:$0xff]
    %v2451 = vld [vmem:[%s3 + $0xc8] sm:$0xff]
    %v2452 = vld [vmem:[%s3 + $0xd0] sm:$0xff]
    %v2453 = vld [vmem:[%s3 + $0xd8] sm:$0xff]
    %v2454 = vld [vmem:[%s3 + $0xe0] sm:$0xff]
    %v2455 = vld [vmem:[%s3 + $0xe8] sm:$0xff]
    %v2456 = vld [vmem:[%s3 + $0xf0] sm:$0xff]
    %v2457 = vld [vmem:[%s3 + $0xf8] sm:$0xff]
    %2459 = vset.pattern.permute.xlu0 9
    %2460 = vperm.xlu0 %2459, %v2426
    %v2461 = vpop.permute.xlu0 %2460
    %2464 = vset.pattern.permute.xlu0 9
    %2465 = vperm.xlu0 %2464, %v2427
    %v2466 = vpop.permute.xlu0 %2465
    %2469 = vset.pattern.permute.xlu0 9
    %2470 = vperm.xlu0 %2469, %v2428
    %v2471 = vpop.permute.xlu0 %2470
    %2474 = vset.pattern.permute.xlu0 9
    %2475 = vperm.xlu0 %2474, %v2429
    %v2476 = vpop.permute.xlu0 %2475
    %2479 = vset.pattern.permute.xlu0 9
    %2480 = vperm.xlu0 %2479, %v2430
    %v2481 = vpop.permute.xlu0 %2480
    %2484 = vset.pattern.permute.xlu0 9
    %2485 = vperm.xlu0 %2484, %v2431
    %v2486 = vpop.permute.xlu0 %2485
    %2489 = vset.pattern.permute.xlu0 9
    %2490 = vperm.xlu0 %2489, %v2432
    %v2491 = vpop.permute.xlu0 %2490
    %2494 = vset.pattern.permute.xlu0 9
    %2495 = vperm.xlu0 %2494, %v2433
    %v2496 = vpop.permute.xlu0 %2495
    %2499 = vset.pattern.permute.xlu0 9
    %2500 = vperm.xlu0 %2499, %v2434
    %v2501 = vpop.permute.xlu0 %2500
    %2504 = vset.pattern.permute.xlu0 9
    %2505 = vperm.xlu0 %2504, %v2435
    %v2506 = vpop.permute.xlu0 %2505
    %2509 = vset.pattern.permute.xlu0 9
    %2510 = vperm.xlu0 %2509, %v2436
    %v2511 = vpop.permute.xlu0 %2510
    %2514 = vset.pattern.permute.xlu0 9
    %2515 = vperm.xlu0 %2514, %v2437
    %v2516 = vpop.permute.xlu0 %2515
    %2519 = vset.pattern.permute.xlu0 9
    %2520 = vperm.xlu0 %2519, %v2438
    %v2521 = vpop.permute.xlu0 %2520
    %2524 = vset.pattern.permute.xlu0 9
    %2525 = vperm.xlu0 %2524, %v2439
    %v2526 = vpop.permute.xlu0 %2525
    %2529 = vset.pattern.permute.xlu0 9
    %2530 = vperm.xlu0 %2529, %v2440
    %v2531 = vpop.permute.xlu0 %2530
    %2534 = vset.pattern.permute.xlu0 9
    %2535 = vperm.xlu0 %2534, %v2441
    %v2536 = vpop.permute.xlu0 %2535
    %2539 = vset.pattern.permute.xlu0 9
    %2540 = vperm.xlu0 %2539, %v2442
    %v2541 = vpop.permute.xlu0 %2540
    %2544 = vset.pattern.permute.xlu0 9
    %2545 = vperm.xlu0 %2544, %v2443
    %v2546 = vpop.permute.xlu0 %2545
    %2549 = vset.pattern.permute.xlu0 9
    %2550 = vperm.xlu0 %2549, %v2444
    %v2551 = vpop.permute.xlu0 %2550
    %2554 = vset.pattern.permute.xlu0 9
    %2555 = vperm.xlu0 %2554, %v2445
    %v2556 = vpop.permute.xlu0 %2555
    %2559 = vset.pattern.permute.xlu0 9
    %2560 = vperm.xlu0 %2559, %v2446
    %v2561 = vpop.permute.xlu0 %2560
    %2564 = vset.pattern.permute.xlu0 9
    %2565 = vperm.xlu0 %2564, %v2447
    %v2566 = vpop.permute.xlu0 %2565
    %2569 = vset.pattern.permute.xlu0 9
    %2570 = vperm.xlu0 %2569, %v2448
    %v2571 = vpop.permute.xlu0 %2570
    %2574 = vset.pattern.permute.xlu0 9
    %2575 = vperm.xlu0 %2574, %v2449
    %v2576 = vpop.permute.xlu0 %2575
    %2579 = vset.pattern.permute.xlu0 9
    %2580 = vperm.xlu0 %2579, %v2450
    %v2581 = vpop.permute.xlu0 %2580
    %2584 = vset.pattern.permute.xlu0 9
    %2585 = vperm.xlu0 %2584, %v2451
    %v2586 = vpop.permute.xlu0 %2585
    %2589 = vset.pattern.permute.xlu0 9
    %2590 = vperm.xlu0 %2589, %v2452
    %v2591 = vpop.permute.xlu0 %2590
    %2594 = vset.pattern.permute.xlu0 9
    %2595 = vperm.xlu0 %2594, %v2453
    %v2596 = vpop.permute.xlu0 %2595
    %2599 = vset.pattern.permute.xlu0 9
    %2600 = vperm.xlu0 %2599, %v2454
    %v2601 = vpop.permute.xlu0 %2600
    %2604 = vset.pattern.permute.xlu0 9
    %2605 = vperm.xlu0 %2604, %v2455
    %v2606 = vpop.permute.xlu0 %2605
    %2609 = vset.pattern.permute.xlu0 9
    %2610 = vperm.xlu0 %2609, %v2456
    %v2611 = vpop.permute.xlu0 %2610
    %2614 = vset.pattern.permute.xlu0 9
    %2615 = vperm.xlu0 %2614, %v2457
    %v2616 = vpop.permute.xlu0 %2615
    %v2619 = vsel %vm126, %v2394, 0
    %v2622 = vsel %vm126, %v2395, 0
    %v2625 = vsel %vm126, %v2396, 0
    %v2628 = vsel %vm126, %v2397, 0
    %v2631 = vsel %vm126, %v2398, 0
    %v2634 = vsel %vm126, %v2399, 0
    %v2637 = vsel %vm126, %v2400, 0
    %v2640 = vsel %vm126, %v2401, 0
    %v2643 = vsel %vm126, %v2402, 0
    %v2646 = vsel %vm126, %v2403, 0
    %v2649 = vsel %vm126, %v2404, 0
    %v2652 = vsel %vm126, %v2405, 0
    %v2655 = vsel %vm126, %v2406, 0
    %v2658 = vsel %vm126, %v2407, 0
    %v2661 = vsel %vm126, %v2408, 0
    %v2664 = vsel %vm126, %v2409, 0
    %v2667 = vsel %vm126, %v2410, 0
    %v2670 = vsel %vm126, %v2411, 0
    %v2673 = vsel %vm126, %v2412, 0
    %v2676 = vsel %vm126, %v2413, 0
    %v2679 = vsel %vm126, %v2414, 0
    %v2682 = vsel %vm126, %v2415, 0
    %v2685 = vsel %vm126, %v2416, 0
    %v2688 = vsel %vm126, %v2417, 0
    %v2691 = vsel %vm126, %v2418, 0
    %v2694 = vsel %vm126, %v2419, 0
    %v2697 = vsel %vm126, %v2420, 0
    %v2700 = vsel %vm126, %v2421, 0
    %v2703 = vsel %vm126, %v2422, 0
    %v2706 = vsel %vm126, %v2423, 0
    %v2709 = vsel %vm126, %v2424, 0
    %v2712 = vsel %vm126, %v2425, 0
    %2714 = vmatpush.msra.mxu0 0.0
    %2715 = vmatpush.msra.mxu0 0.0
    %2716 = vmatpush.msra.mxu0 0.0
    %2717 = vmatpush.msra.mxu0 0.0
    %2718 = vmatpush.msra.mxu0 0.0
    %2719 = vmatpush.msra.mxu0 0.0
    %2720 = vmatpush.msra.mxu0 0.0
    %2721 = vmatpush.msra.mxu0 0.0
    %2722 = vmatpush.msra.mxu0 %v2391
    %2723 = vmatpush.msra.mxu0 %v2388
    %2724 = vmatpush.msra.mxu0 %v2385
    %2725 = vmatpush.msra.mxu0 %v2382
    %2726 = vmatpush.msra.mxu0 %v2379
    %2727 = vmatpush.msra.mxu0 %v2376
    %2728 = vmatpush.msra.mxu0 %v2373
    %2729 = vmatpush.msra.mxu0 %v2370
    %2730 = vmatmul.f32.gmra.mxu0 %v2619
    %v2731 = vpop.f32.mrf.mxu0
    %v2732 = vadd.f32 %v2461, %v2731
    %2733 = vmatmul.f32.gmra.mxu0 %v2622
    %v2734 = vpop.f32.mrf.mxu0
    %v2735 = vadd.f32 %v2466, %v2734
    %2736 = vmatmul.f32.gmra.mxu0 %v2625
    %v2737 = vpop.f32.mrf.mxu0
    %v2738 = vadd.f32 %v2471, %v2737
    %2739 = vmatmul.f32.gmra.mxu0 %v2628
    %v2740 = vpop.f32.mrf.mxu0
    %v2741 = vadd.f32 %v2476, %v2740
    %2742 = vmatmul.f32.gmra.mxu0 %v2631
    %v2743 = vpop.f32.mrf.mxu0
    %v2744 = vadd.f32 %v2481, %v2743
    %2745 = vmatmul.f32.gmra.mxu0 %v2634
    %v2746 = vpop.f32.mrf.mxu0
    %v2747 = vadd.f32 %v2486, %v2746
    %2748 = vmatmul.f32.gmra.mxu0 %v2637
    %v2749 = vpop.f32.mrf.mxu0
    %v2750 = vadd.f32 %v2491, %v2749
    %2751 = vmatmul.f32.gmra.mxu0 %v2640
    %v2752 = vpop.f32.mrf.mxu0
    %v2753 = vadd.f32 %v2496, %v2752
    %2754 = vmatmul.f32.gmra.mxu0 %v2643
    %v2755 = vpop.f32.mrf.mxu0
    %v2756 = vadd.f32 %v2501, %v2755
    %2757 = vmatmul.f32.gmra.mxu0 %v2646
    %v2758 = vpop.f32.mrf.mxu0
    %v2759 = vadd.f32 %v2506, %v2758
    %2760 = vmatmul.f32.gmra.mxu0 %v2649
    %v2761 = vpop.f32.mrf.mxu0
    %v2762 = vadd.f32 %v2511, %v2761
    %2763 = vmatmul.f32.gmra.mxu0 %v2652
    %v2764 = vpop.f32.mrf.mxu0
    %v2765 = vadd.f32 %v2516, %v2764
    %2766 = vmatmul.f32.gmra.mxu0 %v2655
    %v2767 = vpop.f32.mrf.mxu0
    %v2768 = vadd.f32 %v2521, %v2767
    %2769 = vmatmul.f32.gmra.mxu0 %v2658
    %v2770 = vpop.f32.mrf.mxu0
    %v2771 = vadd.f32 %v2526, %v2770
    %2772 = vmatmul.f32.gmra.mxu0 %v2661
    %v2773 = vpop.f32.mrf.mxu0
    %v2774 = vadd.f32 %v2531, %v2773
    %2775 = vmatmul.f32.gmra.mxu0 %v2664
    %v2776 = vpop.f32.mrf.mxu0
    %v2777 = vadd.f32 %v2536, %v2776
    %2778 = vmatmul.f32.gmra.mxu0 %v2667
    %v2779 = vpop.f32.mrf.mxu0
    %v2780 = vadd.f32 %v2541, %v2779
    %2781 = vmatmul.f32.gmra.mxu0 %v2670
    %v2782 = vpop.f32.mrf.mxu0
    %v2783 = vadd.f32 %v2546, %v2782
    %2784 = vmatmul.f32.gmra.mxu0 %v2673
    %v2785 = vpop.f32.mrf.mxu0
    %v2786 = vadd.f32 %v2551, %v2785
    %2787 = vmatmul.f32.gmra.mxu0 %v2676
    %v2788 = vpop.f32.mrf.mxu0
    %v2789 = vadd.f32 %v2556, %v2788
    %2790 = vmatmul.f32.gmra.mxu0 %v2679
    %v2791 = vpop.f32.mrf.mxu0
    %v2792 = vadd.f32 %v2561, %v2791
    %2793 = vmatmul.f32.gmra.mxu0 %v2682
    %v2794 = vpop.f32.mrf.mxu0
    %v2795 = vadd.f32 %v2566, %v2794
    %2796 = vmatmul.f32.gmra.mxu0 %v2685
    %v2797 = vpop.f32.mrf.mxu0
    %v2798 = vadd.f32 %v2571, %v2797
    %2799 = vmatmul.f32.gmra.mxu0 %v2688
    %v2800 = vpop.f32.mrf.mxu0
    %v2801 = vadd.f32 %v2576, %v2800
    %2802 = vmatmul.f32.gmra.mxu0 %v2691
    %v2803 = vpop.f32.mrf.mxu0
    %v2804 = vadd.f32 %v2581, %v2803
    %2805 = vmatmul.f32.gmra.mxu0 %v2694
    %v2806 = vpop.f32.mrf.mxu0
    %v2807 = vadd.f32 %v2586, %v2806
    %2808 = vmatmul.f32.gmra.mxu0 %v2697
    %v2809 = vpop.f32.mrf.mxu0
    %v2810 = vadd.f32 %v2591, %v2809
    %2811 = vmatmul.f32.gmra.mxu0 %v2700
    %v2812 = vpop.f32.mrf.mxu0
    %v2813 = vadd.f32 %v2596, %v2812
    %2814 = vmatmul.f32.gmra.mxu0 %v2703
    %v2815 = vpop.f32.mrf.mxu0
    %v2816 = vadd.f32 %v2601, %v2815
    %2817 = vmatmul.f32.gmra.mxu0 %v2706
    %v2818 = vpop.f32.mrf.mxu0
    %v2819 = vadd.f32 %v2606, %v2818
    %2820 = vmatmul.f32.gmra.mxu0 %v2709
    %v2821 = vpop.f32.mrf.mxu0
    %v2822 = vadd.f32 %v2611, %v2821
    %2823 = vmatmul.f32.gmra.mxu0 %v2712
    %v2824 = vpop.f32.mrf.mxu0
    %v2825 = vadd.f32 %v2616, %v2824
    %2826 = vdwg.mxu0
    %2827 = vmatpush.msra.mxu0 0.0
    %2828 = vmatpush.msra.mxu0 0.0
    %2829 = vmatpush.msra.mxu0 0.0
    %2830 = vmatpush.msra.mxu0 0.0
    %2831 = vmatpush.msra.mxu0 0.0
    %2832 = vmatpush.msra.mxu0 0.0
    %2833 = vmatpush.msra.mxu0 0.0
    %2834 = vmatpush.msra.mxu0 0.0
    %2835 = vmatpush.msra.mxu0 %v2392
    %2836 = vmatpush.msra.mxu0 %v2389
    %2837 = vmatpush.msra.mxu0 %v2386
    %2838 = vmatpush.msra.mxu0 %v2383
    %2839 = vmatpush.msra.mxu0 %v2380
    %2840 = vmatpush.msra.mxu0 %v2377
    %2841 = vmatpush.msra.mxu0 %v2374
    %2842 = vmatpush.msra.mxu0 %v2371
    %2843 = vmatmul.f32.gmra.mxu0 %v2619
    %v2844 = vpop.f32.mrf.mxu0
    %v2845 = vadd.f32 %v2461, %v2844
    %2846 = vmatmul.f32.gmra.mxu0 %v2622
    %v2847 = vpop.f32.mrf.mxu0
    %v2848 = vadd.f32 %v2466, %v2847
    %2849 = vmatmul.f32.gmra.mxu0 %v2625
    %v2850 = vpop.f32.mrf.mxu0
    %v2851 = vadd.f32 %v2471, %v2850
    %2852 = vmatmul.f32.gmra.mxu0 %v2628
    %v2853 = vpop.f32.mrf.mxu0
    %v2854 = vadd.f32 %v2476, %v2853
    %2855 = vmatmul.f32.gmra.mxu0 %v2631
    %v2856 = vpop.f32.mrf.mxu0
    %v2857 = vadd.f32 %v2481, %v2856
    %2858 = vmatmul.f32.gmra.mxu0 %v2634
    %v2859 = vpop.f32.mrf.mxu0
    %v2860 = vadd.f32 %v2486, %v2859
    %2861 = vmatmul.f32.gmra.mxu0 %v2637
    %v2862 = vpop.f32.mrf.mxu0
    %v2863 = vadd.f32 %v2491, %v2862
    %2864 = vmatmul.f32.gmra.mxu0 %v2640
    %v2865 = vpop.f32.mrf.mxu0
    %v2866 = vadd.f32 %v2496, %v2865
    %2867 = vmatmul.f32.gmra.mxu0 %v2643
    %v2868 = vpop.f32.mrf.mxu0
    %v2869 = vadd.f32 %v2501, %v2868
    %2870 = vmatmul.f32.gmra.mxu0 %v2646
    %v2871 = vpop.f32.mrf.mxu0
    %v2872 = vadd.f32 %v2506, %v2871
    %2873 = vmatmul.f32.gmra.mxu0 %v2649
    %v2874 = vpop.f32.mrf.mxu0
    %v2875 = vadd.f32 %v2511, %v2874
    %2876 = vmatmul.f32.gmra.mxu0 %v2652
    %v2877 = vpop.f32.mrf.mxu0
    %v2878 = vadd.f32 %v2516, %v2877
    %2879 = vmatmul.f32.gmra.mxu0 %v2655
    %v2880 = vpop.f32.mrf.mxu0
    %v2881 = vadd.f32 %v2521, %v2880
    %2882 = vmatmul.f32.gmra.mxu0 %v2658
    %v2883 = vpop.f32.mrf.mxu0
    %v2884 = vadd.f32 %v2526, %v2883
    %2885 = vmatmul.f32.gmra.mxu0 %v2661
    %v2886 = vpop.f32.mrf.mxu0
    %v2887 = vadd.f32 %v2531, %v2886
    %2888 = vmatmul.f32.gmra.mxu0 %v2664
    %v2889 = vpop.f32.mrf.mxu0
    %v2890 = vadd.f32 %v2536, %v2889
    %2891 = vmatmul.f32.gmra.mxu0 %v2667
    %v2892 = vpop.f32.mrf.mxu0
    %v2893 = vadd.f32 %v2541, %v2892
    %2894 = vmatmul.f32.gmra.mxu0 %v2670
    %v2895 = vpop.f32.mrf.mxu0
    %v2896 = vadd.f32 %v2546, %v2895
    %2897 = vmatmul.f32.gmra.mxu0 %v2673
    %v2898 = vpop.f32.mrf.mxu0
    %v2899 = vadd.f32 %v2551, %v2898
    %2900 = vmatmul.f32.gmra.mxu0 %v2676
    %v2901 = vpop.f32.mrf.mxu0
    %v2902 = vadd.f32 %v2556, %v2901
    %2903 = vmatmul.f32.gmra.mxu0 %v2679
    %v2904 = vpop.f32.mrf.mxu0
    %v2905 = vadd.f32 %v2561, %v2904
    %2906 = vmatmul.f32.gmra.mxu0 %v2682
    %v2907 = vpop.f32.mrf.mxu0
    %v2908 = vadd.f32 %v2566, %v2907
    %2909 = vmatmul.f32.gmra.mxu0 %v2685
    %v2910 = vpop.f32.mrf.mxu0
    %v2911 = vadd.f32 %v2571, %v2910
    %2912 = vmatmul.f32.gmra.mxu0 %v2688
    %v2913 = vpop.f32.mrf.mxu0
    %v2914 = vadd.f32 %v2576, %v2913
    %2915 = vmatmul.f32.gmra.mxu0 %v2691
    %v2916 = vpop.f32.mrf.mxu0
    %v2917 = vadd.f32 %v2581, %v2916
    %2918 = vmatmul.f32.gmra.mxu0 %v2694
    %v2919 = vpop.f32.mrf.mxu0
    %v2920 = vadd.f32 %v2586, %v2919
    %2921 = vmatmul.f32.gmra.mxu0 %v2697
    %v2922 = vpop.f32.mrf.mxu0
    %v2923 = vadd.f32 %v2591, %v2922
    %2924 = vmatmul.f32.gmra.mxu0 %v2700
    %v2925 = vpop.f32.mrf.mxu0
    %v2926 = vadd.f32 %v2596, %v2925
    %2927 = vmatmul.f32.gmra.mxu0 %v2703
    %v2928 = vpop.f32.mrf.mxu0
    %v2929 = vadd.f32 %v2601, %v2928
    %2930 = vmatmul.f32.gmra.mxu0 %v2706
    %v2931 = vpop.f32.mrf.mxu0
    %v2932 = vadd.f32 %v2606, %v2931
    %2933 = vmatmul.f32.gmra.mxu0 %v2709
    %v2934 = vpop.f32.mrf.mxu0
    %v2935 = vadd.f32 %v2611, %v2934
    %2936 = vmatmul.f32.gmra.mxu0 %v2712
    %v2937 = vpop.f32.mrf.mxu0
    %v2938 = vadd.f32 %v2616, %v2937
    %2939 = vdwg.mxu0
    %2940 = vmatpush.msra.mxu0 0.0
    %2941 = vmatpush.msra.mxu0 0.0
    %2942 = vmatpush.msra.mxu0 0.0
    %2943 = vmatpush.msra.mxu0 0.0
    %2944 = vmatpush.msra.mxu0 0.0
    %2945 = vmatpush.msra.mxu0 0.0
    %2946 = vmatpush.msra.mxu0 0.0
    %2947 = vmatpush.msra.mxu0 0.0
    %2948 = vmatpush.msra.mxu0 %v2393
    %2949 = vmatpush.msra.mxu0 %v2390
    %2950 = vmatpush.msra.mxu0 %v2387
    %2951 = vmatpush.msra.mxu0 %v2384
    %2952 = vmatpush.msra.mxu0 %v2381
    %2953 = vmatpush.msra.mxu0 %v2378
    %2954 = vmatpush.msra.mxu0 %v2375
    %2955 = vmatpush.msra.mxu0 %v2372
    %2956 = vmatmul.f32.gmra.mxu0 %v2619
    %v2957 = vpop.f32.mrf.mxu0
    %v2958 = vadd.f32 %v2461, %v2957
    %2959 = vmatmul.f32.gmra.mxu0 %v2622
    %v2960 = vpop.f32.mrf.mxu0
    %v2961 = vadd.f32 %v2466, %v2960
    %2962 = vmatmul.f32.gmra.mxu0 %v2625
    %v2963 = vpop.f32.mrf.mxu0
    %v2964 = vadd.f32 %v2471, %v2963
    %2965 = vmatmul.f32.gmra.mxu0 %v2628
    %v2966 = vpop.f32.mrf.mxu0
    %v2967 = vadd.f32 %v2476, %v2966
    %2968 = vmatmul.f32.gmra.mxu0 %v2631
    %v2969 = vpop.f32.mrf.mxu0
    %v2970 = vadd.f32 %v2481, %v2969
    %2971 = vmatmul.f32.gmra.mxu0 %v2634
    %v2972 = vpop.f32.mrf.mxu0
    %v2973 = vadd.f32 %v2486, %v2972
    %2974 = vmatmul.f32.gmra.mxu0 %v2637
    %v2975 = vpop.f32.mrf.mxu0
    %v2976 = vadd.f32 %v2491, %v2975
    %2977 = vmatmul.f32.gmra.mxu0 %v2640
    %v2978 = vpop.f32.mrf.mxu0
    %v2979 = vadd.f32 %v2496, %v2978
    %2980 = vmatmul.f32.gmra.mxu0 %v2643
    %v2981 = vpop.f32.mrf.mxu0
    %v2982 = vadd.f32 %v2501, %v2981
    %2983 = vmatmul.f32.gmra.mxu0 %v2646
    %v2984 = vpop.f32.mrf.mxu0
    %v2985 = vadd.f32 %v2506, %v2984
    %2986 = vmatmul.f32.gmra.mxu0 %v2649
    %v2987 = vpop.f32.mrf.mxu0
    %v2988 = vadd.f32 %v2511, %v2987
    %2989 = vmatmul.f32.gmra.mxu0 %v2652
    %v2990 = vpop.f32.mrf.mxu0
    %v2991 = vadd.f32 %v2516, %v2990
    %2992 = vmatmul.f32.gmra.mxu0 %v2655
    %v2993 = vpop.f32.mrf.mxu0
    %v2994 = vadd.f32 %v2521, %v2993
    %2995 = vmatmul.f32.gmra.mxu0 %v2658
    %v2996 = vpop.f32.mrf.mxu0
    %v2997 = vadd.f32 %v2526, %v2996
    %2998 = vmatmul.f32.gmra.mxu0 %v2661
    %v2999 = vpop.f32.mrf.mxu0
    %v3000 = vadd.f32 %v2531, %v2999
    %3001 = vmatmul.f32.gmra.mxu0 %v2664
    %v3002 = vpop.f32.mrf.mxu0
    %v3003 = vadd.f32 %v2536, %v3002
    %3004 = vmatmul.f32.gmra.mxu0 %v2667
    %v3005 = vpop.f32.mrf.mxu0
    %v3006 = vadd.f32 %v2541, %v3005
    %3007 = vmatmul.f32.gmra.mxu0 %v2670
    %v3008 = vpop.f32.mrf.mxu0
    %v3009 = vadd.f32 %v2546, %v3008
    %3010 = vmatmul.f32.gmra.mxu0 %v2673
    %v3011 = vpop.f32.mrf.mxu0
    %v3012 = vadd.f32 %v2551, %v3011
    %3013 = vmatmul.f32.gmra.mxu0 %v2676
    %v3014 = vpop.f32.mrf.mxu0
    %v3015 = vadd.f32 %v2556, %v3014
    %3016 = vmatmul.f32.gmra.mxu0 %v2679
    %v3017 = vpop.f32.mrf.mxu0
    %v3018 = vadd.f32 %v2561, %v3017
    %3019 = vmatmul.f32.gmra.mxu0 %v2682
    %v3020 = vpop.f32.mrf.mxu0
    %v3021 = vadd.f32 %v2566, %v3020
    %3022 = vmatmul.f32.gmra.mxu0 %v2685
    %v3023 = vpop.f32.mrf.mxu0
    %v3024 = vadd.f32 %v2571, %v3023
    %3025 = vmatmul.f32.gmra.mxu0 %v2688
    %v3026 = vpop.f32.mrf.mxu0
    %v3027 = vadd.f32 %v2576, %v3026
    %3028 = vmatmul.f32.gmra.mxu0 %v2691
    %v3029 = vpop.f32.mrf.mxu0
    %v3030 = vadd.f32 %v2581, %v3029
    %3031 = vmatmul.f32.gmra.mxu0 %v2694
    %v3032 = vpop.f32.mrf.mxu0
    %v3033 = vadd.f32 %v2586, %v3032
    %3034 = vmatmul.f32.gmra.mxu0 %v2697
    %v3035 = vpop.f32.mrf.mxu0
    %v3036 = vadd.f32 %v2591, %v3035
    %3037 = vmatmul.f32.gmra.mxu0 %v2700
    %v3038 = vpop.f32.mrf.mxu0
    %v3039 = vadd.f32 %v2596, %v3038
    %3040 = vmatmul.f32.gmra.mxu0 %v2703
    %v3041 = vpop.f32.mrf.mxu0
    %v3042 = vadd.f32 %v2601, %v3041
    %3043 = vmatmul.f32.gmra.mxu0 %v2706
    %v3044 = vpop.f32.mrf.mxu0
    %v3045 = vadd.f32 %v2606, %v3044
    %3046 = vmatmul.f32.gmra.mxu0 %v2709
    %v3047 = vpop.f32.mrf.mxu0
    %v3048 = vadd.f32 %v2611, %v3047
    %3049 = vmatmul.f32.gmra.mxu0 %v2712
    %v3050 = vpop.f32.mrf.mxu0
    %v3051 = vadd.f32 %v2616, %v3050
    %3052 = vdwg.mxu0
    %3053 = vst [vmem:[#allocation5] sm:$0xff] %v2732
    %3054 = vst [vmem:[#allocation5 + $0x8] sm:$0xff] %v2845
    %3055 = vst [vmem:[#allocation5 + $0x10] sm:$0xff] %v2958
    %3056 = vst [vmem:[#allocation5 + $0x18] sm:$0xff] %v2735
    %3057 = vst [vmem:[#allocation5 + $0x20] sm:$0xff] %v2848
    %3058 = vst [vmem:[#allocation5 + $0x28] sm:$0xff] %v2961
    %3059 = vst [vmem:[#allocation5 + $0x30] sm:$0xff] %v2738
    %3060 = vst [vmem:[#allocation5 + $0x38] sm:$0xff] %v2851
    %3061 = vst [vmem:[#allocation5 + $0x40] sm:$0xff] %v2964
    %3062 = vst [vmem:[#allocation5 + $0x48] sm:$0xff] %v2741
    %3063 = vst [vmem:[#allocation5 + $0x50] sm:$0xff] %v2854
    %3064 = vst [vmem:[#allocation5 + $0x58] sm:$0xff] %v2967
    %3065 = vst [vmem:[#allocation5 + $0x60] sm:$0xff] %v2744
    %3066 = vst [vmem:[#allocation5 + $0x68] sm:$0xff] %v2857
    %3067 = vst [vmem:[#allocation5 + $0x70] sm:$0xff] %v2970
    %3068 = vst [vmem:[#allocation5 + $0x78] sm:$0xff] %v2747
    %3069 = vst [vmem:[#allocation5 + $0x80] sm:$0xff] %v2860
    %3070 = vst [vmem:[#allocation5 + $0x88] sm:$0xff] %v2973
    %3071 = vst [vmem:[#allocation5 + $0x90] sm:$0xff] %v2750
    %3072 = vst [vmem:[#allocation5 + $0x98] sm:$0xff] %v2863
    %3073 = vst [vmem:[#allocation5 + $0xa0] sm:$0xff] %v2976
    %3074 = vst [vmem:[#allocation5 + $0xa8] sm:$0xff] %v2753
    %3075 = vst [vmem:[#allocation5 + $0xb0] sm:$0xff] %v2866
    %3076 = vst [vmem:[#allocation5 + $0xb8] sm:$0xff] %v2979
    %3077 = vst [vmem:[#allocation5 + $0xc0] sm:$0xff] %v2756
    %3078 = vst [vmem:[#allocation5 + $0xc8] sm:$0xff] %v2869
    %3079 = vst [vmem:[#allocation5 + $0xd0] sm:$0xff] %v2982
    %3080 = vst [vmem:[#allocation5 + $0xd8] sm:$0xff] %v2759
    %3081 = vst [vmem:[#allocation5 + $0xe0] sm:$0xff] %v2872
    %3082 = vst [vmem:[#allocation5 + $0xe8] sm:$0xff] %v2985
    %3083 = vst [vmem:[#allocation5 + $0xf0] sm:$0xff] %v2762
    %3084 = vst [vmem:[#allocation5 + $0xf8] sm:$0xff] %v2875
    %3085 = vst [vmem:[#allocation5 + $0x100] sm:$0xff] %v2988
    %3086 = vst [vmem:[#allocation5 + $0x108] sm:$0xff] %v2765
    %3087 = vst [vmem:[#allocation5 + $0x110] sm:$0xff] %v2878
    %3088 = vst [vmem:[#allocation5 + $0x118] sm:$0xff] %v2991
    %3089 = vst [vmem:[#allocation5 + $0x120] sm:$0xff] %v2768
    %3090 = vst [vmem:[#allocation5 + $0x128] sm:$0xff] %v2881
    %3091 = vst [vmem:[#allocation5 + $0x130] sm:$0xff] %v2994
    %3092 = vst [vmem:[#allocation5 + $0x138] sm:$0xff] %v2771
    %3093 = vst [vmem:[#allocation5 + $0x140] sm:$0xff] %v2884
    %3094 = vst [vmem:[#allocation5 + $0x148] sm:$0xff] %v2997
    %3095 = vst [vmem:[#allocation5 + $0x150] sm:$0xff] %v2774
    %3096 = vst [vmem:[#allocation5 + $0x158] sm:$0xff] %v2887
    %3097 = vst [vmem:[#allocation5 + $0x160] sm:$0xff] %v3000
    %3098 = vst [vmem:[#allocation5 + $0x168] sm:$0xff] %v2777
    %3099 = vst [vmem:[#allocation5 + $0x170] sm:$0xff] %v2890
    %3100 = vst [vmem:[#allocation5 + $0x178] sm:$0xff] %v3003
    %3101 = vst [vmem:[#allocation5 + $0x180] sm:$0xff] %v2780
    %3102 = vst [vmem:[#allocation5 + $0x188] sm:$0xff] %v2893
    %3103 = vst [vmem:[#allocation5 + $0x190] sm:$0xff] %v3006
    %3104 = vst [vmem:[#allocation5 + $0x198] sm:$0xff] %v2783
    %3105 = vst [vmem:[#allocation5 + $0x1a0] sm:$0xff] %v2896
    %3106 = vst [vmem:[#allocation5 + $0x1a8] sm:$0xff] %v3009
    %3107 = vst [vmem:[#allocation5 + $0x1b0] sm:$0xff] %v2786
    %3108 = vst [vmem:[#allocation5 + $0x1b8] sm:$0xff] %v2899
    %3109 = vst [vmem:[#allocation5 + $0x1c0] sm:$0xff] %v3012
    %3110 = vst [vmem:[#allocation5 + $0x1c8] sm:$0xff] %v2789
    %3111 = vst [vmem:[#allocation5 + $0x1d0] sm:$0xff] %v2902
    %3112 = vst [vmem:[#allocation5 + $0x1d8] sm:$0xff] %v3015
    %3113 = vst [vmem:[#allocation5 + $0x1e0] sm:$0xff] %v2792
    %3114 = vst [vmem:[#allocation5 + $0x1e8] sm:$0xff] %v2905
    %3115 = vst [vmem:[#allocation5 + $0x1f0] sm:$0xff] %v3018
    %3116 = vst [vmem:[#allocation5 + $0x1f8] sm:$0xff] %v2795
    %3117 = vst [vmem:[#allocation5 + $0x200] sm:$0xff] %v2908
    %3118 = vst [vmem:[#allocation5 + $0x208] sm:$0xff] %v3021
    %3119 = vst [vmem:[#allocation5 + $0x210] sm:$0xff] %v2798
    %3120 = vst [vmem:[#allocation5 + $0x218] sm:$0xff] %v2911
    %3121 = vst [vmem:[#allocation5 + $0x220] sm:$0xff] %v3024
    %3122 = vst [vmem:[#allocation5 + $0x228] sm:$0xff] %v2801
    %3123 = vst [vmem:[#allocation5 + $0x230] sm:$0xff] %v2914
    %3124 = vst [vmem:[#allocation5 + $0x238] sm:$0xff] %v3027
    %3125 = vst [vmem:[#allocation5 + $0x240] sm:$0xff] %v2804
    %3126 = vst [vmem:[#allocation5 + $0x248] sm:$0xff] %v2917
    %3127 = vst [vmem:[#allocation5 + $0x250] sm:$0xff] %v3030
    %3128 = vst [vmem:[#allocation5 + $0x258] sm:$0xff] %v2807
    %3129 = vst [vmem:[#allocation5 + $0x260] sm:$0xff] %v2920
    %3130 = vst [vmem:[#allocation5 + $0x268] sm:$0xff] %v3033
    %3131 = vst [vmem:[#allocation5 + $0x270] sm:$0xff] %v2810
    %3132 = vst [vmem:[#allocation5 + $0x278] sm:$0xff] %v2923
    %3133 = vst [vmem:[#allocation5 + $0x280] sm:$0xff] %v3036
    %3134 = vst [vmem:[#allocation5 + $0x288] sm:$0xff] %v2813
    %3135 = vst [vmem:[#allocation5 + $0x290] sm:$0xff] %v2926
    %3136 = vst [vmem:[#allocation5 + $0x298] sm:$0xff] %v3039
    %3137 = vst [vmem:[#allocation5 + $0x2a0] sm:$0xff] %v2816
    %3138 = vst [vmem:[#allocation5 + $0x2a8] sm:$0xff] %v2929
    %3139 = vst [vmem:[#allocation5 + $0x2b0] sm:$0xff] %v3042
    %3140 = vst [vmem:[#allocation5 + $0x2b8] sm:$0xff] %v2819
    %3141 = vst [vmem:[#allocation5 + $0x2c0] sm:$0xff] %v2932
    %3142 = vst [vmem:[#allocation5 + $0x2c8] sm:$0xff] %v3045
    %3143 = vst [vmem:[#allocation5 + $0x2d0] sm:$0xff] %v2822
    %3144 = vst [vmem:[#allocation5 + $0x2d8] sm:$0xff] %v2935
    %3145 = vst [vmem:[#allocation5 + $0x2e0] sm:$0xff] %v3048
    %3146 = vst [vmem:[#allocation5 + $0x2e8] sm:$0xff] %v2825
    %3147 = vst [vmem:[#allocation5 + $0x2f0] sm:$0xff] %v2938
    %3148 = vst [vmem:[#allocation5 + $0x2f8] sm:$0xff] %v3051
    // Predicated region
    $region22: #{tpu_custom_call.1} parent=1 // pred_check
      _
    $region23: #{tpu_custom_call.1} parent=1 // pred_check_branch
      %3150 = sbr.rel (0) target = $region25
    $region24: #{tpu_custom_call.1} parent=1 // pred_region
      %3152 = vsyncadd [#allocation4], 0
      %s3153 = sshll.u32 [#allocation5], 4
      %s3154 = int_to_ptr.vmem [resolvable:$true] %s3153
      %s3155 = sshll.u32 %s4, 4
      %s3156 = int_to_ptr.hbm [resolvable:$true] %s3155
      %3161 = dma.vmem_to_hbm [thread:$0]  %s3154, 12288, %s3156, [#allocation4], 384, 384, 24
    $region25: #{tpu_custom_call.1} parent=1 // pred_fallthru
      _
    // Predicated region
    $region26: #{tpu_custom_call.1} parent=1 // pred_check
      _
    $region27: #{tpu_custom_call.1} parent=1 // pred_check_branch
      %3163 = sbr.rel (0) target = $region29
    $region28: #{tpu_custom_call.1} parent=1 // pred_region
      %3165 = dma.done [#allocation4], 12288
    $region29: #{tpu_custom_call.1} parent=1 // pred_fallthru
      _
    %3166 = vsyncpa [#allocation3], 1
    %3167 = vsyncpa [#allocation4], 1

</llo_original>
